<compile_context>
chip_gen: v7x
topology: tpu7x:2x2x1
jax: 0.10.0
libtpu: 0.0.40
codegen_flags: <defaults>
</compile_context>

<pallas_src>
import math

import jax
import jax.numpy as jnp
from jax.experimental import pallas as pl
from jax.experimental.pallas import tpu as pltpu


# ----------------------------------------------------------------------------
# Fused FFN kernel: applies every (Linear -> SiLU) layer on one M-tile.
#   refs layout: (x_ref, w0, b0, w1, b1, ..., w_{L-1}, b_{L-1}, o_ref)
# ----------------------------------------------------------------------------
def make_ffn_kernel(n_layers: int):
    def ffn_kernel(x_ref, *refs):
        o_ref = refs[-1]
        wb_refs = refs[:-1]

        h = x_ref[...]                            # bf16 (or f32) activation tile
        for i in range(n_layers):                 # unrolled at trace time
            w = wb_refs[2 * i][...]               # [K_i, N_i] matmul dtype, VMEM-resident
            b = wb_refs[2 * i + 1][...]           # [1,  N_i] f32, VMEM-resident
            # MXU matmul in the operand dtype, accumulated in f32.
            y = jnp.dot(h.astype(w.dtype), w, preferred_element_type=jnp.float32)
            y = y + b                             # bias-add in f32 (VPU)
            h = y * jax.nn.sigmoid(y)             # SiLU in f32 (VPU + EUP; v5e has no bf16 VPU)

        # TODO(synk): out_size < 128 lanes forces masked (lane-sparse) stores; if
        # out_size stays sub-128 at production sizes, write a lane-dense
        # (block_m // k, k * out_size) slab here and reshape outside pallas_call.
        o_ref[...] = h.astype(o_ref.dtype)

    return ffn_kernel


# ----------------------------------------------------------------------------
# block_m selection: biggest tile that divides M and fits a conservative VMEM
# budget (double-buffered activation in + f32 out), capped at 1024 rows.
# ----------------------------------------------------------------------------
def _pick_block_m(M: int, in_size: int, out_size: int, act_bytes: int, sublane: int) -> int:
    budget = 12 * 1024 * 1024           # fits v5e 16 MiB / v7x 32 MiB scoped VMEM w/ headroom
    per_row = 2 * (in_size * act_bytes + out_size * 4)
    cap = max(sublane, (budget // max(per_row, 1)) // sublane * sublane)
    cap = min(cap, 1024)                # past ~1K rows/step there is nothing left to amortize
    block_m = min(M, cap)
    block_m -= block_m % sublane
    block_m = max(block_m, min(M, sublane))
    while block_m > sublane and M % block_m != 0:
        block_m -= sublane
    return block_m


# ----------------------------------------------------------------------------
# Wrapper: single pallas_call over an M-tiled grid; weights/biases full-extent.
# ----------------------------------------------------------------------------
def feedforward_forward(params, x: jax.Array, *, block_m: int | None = None,
                        matmul_dtype=jnp.bfloat16) -> jax.Array:
    M, in_size = x.shape
    n_layers = len(params)
    out_size = params[-1][0].shape[1]
    out_dtype = x.dtype

    use_bf16 = jnp.dtype(matmul_dtype) == jnp.dtype(jnp.bfloat16)
    sublane = 16 if use_bf16 else 8     # sublane packing granularity for the M-tile

    if block_m is None:
        block_m = _pick_block_m(M, in_size, out_size,
                                act_bytes=2 if use_bf16 else 4, sublane=sublane)
    assert M % block_m == 0, "batch must be divisible by block_m (pad M upstream)"
    assert block_m % sublane == 0, f"block_m must be a multiple of {sublane}"

    grid = (M // block_m,)

    # Cast matmul operands once, wrapper-side: halves the activation DMA bytes
    # and feeds the MXU its native bf16 path on v6e/v7x (f32 accumulation kept).
    x_in = x.astype(matmul_dtype) if x.dtype != jnp.dtype(matmul_dtype) else x
    inputs = [x_in]
    for (w, b) in params:
        inputs.append(w.astype(matmul_dtype))
        inputs.append(b.reshape(1, -1).astype(jnp.float32))

    # Megacore split only pays off when there are >= 2 grid steps of real work.
    dim_sem = ("parallel",) if grid[0] > 1 else ("arbitrary",)

    def build_and_run(single_buffer_weights: bool):
        # Activation tile marches down the batch axis.
        in_specs = [pl.BlockSpec((block_m, in_size), lambda i: (i, 0))]
        # Weights / biases: full-extent, constant index_map => fetched once and
        # VMEM-resident.  Single-buffered: the second pipeline buffer is pure
        # VMEM waste for a block whose index never changes.
        wb_kwargs = dict(pipeline_mode=pl.Buffered(1)) if single_buffer_weights else {}
        for (w, b) in params:
            din, dout = w.shape
            in_specs.append(pl.BlockSpec((din, dout), lambda i: (0, 0), **wb_kwargs))
            in_specs.append(pl.BlockSpec((1, dout), lambda i: (0, 0), **wb_kwargs))
        out_spec = pl.BlockSpec((block_m, out_size), lambda i: (i, 0))

        return pl.pallas_call(
            make_ffn_kernel(n_layers),
            out_shape=jax.ShapeDtypeStruct((M, out_size), out_dtype),
            grid=grid,
            in_specs=in_specs,
            out_specs=out_spec,
            compiler_params=pltpu.CompilerParams(dimension_semantics=dim_sem),
        )(*inputs)

    try:
        return build_and_run(single_buffer_weights=True)
    except Exception:
        # pipeline_mode=pl.Buffered(1) unsupported on this jax build: fall back
        # to default double-buffered weight blocks (costs VMEM, not correctness).
        return build_and_run(single_buffer_weights=False)


# ----------------------------------------------------------------------------
# Parameter construction (mirrors nn.Linear init: uniform +/- 1/sqrt(fan_in)).
# ----------------------------------------------------------------------------
def init_feedforward_params(key, in_size: int, out_size: int, layers: int,
                            dtype=jnp.float32):
    dims = []
    fc_in = in_size
    for _ in range(layers - 1):
        fc_out = fc_in // 4
        dims.append((fc_in, fc_out))
        fc_in = fc_out
    dims.append((fc_in, out_size))

    params = []
    for (din, dout) in dims:
        key, kw, kb = jax.random.split(key, 3)
        bound = 1.0 / math.sqrt(din)
        # stored as [in, out] (transpose of PyTorch's [out, in])
        w = jax.random.uniform(kw, (din, dout), dtype, minval=-bound, maxval=bound)
        b = jax.random.uniform(kb, (dout,), dtype, minval=-bound, maxval=bound)
        params.append((w, b))
    return params


# Pure-JAX reference.  matmul_dtype lets us match the kernel's operand rounding.
def feedforward_ref(params, x, matmul_dtype=jnp.float32):
    h = x.astype(jnp.float32)
    for (w, b) in params:
        y = jnp.dot(h.astype(matmul_dtype), w.astype(matmul_dtype),
                    preferred_element_type=jnp.float32) + b.astype(jnp.float32)
        h = y * jax.nn.sigmoid(y)
    return h


if __name__ == "__main__":
    # in_size must survive two //4 shrinks for layers=3: 256 -> 64 -> 16 -> 32.
    batch, in_size, out_size, n_layers = 128, 256, 32, 3

    key = jax.random.PRNGKey(0)
    key_x, key_p = jax.random.split(key)
    x = jax.random.normal(key_x, (batch, in_size), jnp.float32)
    params = init_feedforward_params(key_p, in_size, out_size, n_layers)

    # block_m auto-selects the full batch (single grid step) at this size.
    out = feedforward_forward(params, x)
    out = jax.block_until_ready(out)
    assert out.shape == (batch, out_size)

    # Tight check against a reference using the SAME bf16 operands / f32 accumulation.
    ref_matched = feedforward_ref(params, x, matmul_dtype=jnp.bfloat16)
    assert jnp.allclose(out, ref_matched, atol=1e-4, rtol=1e-4), \
        "mismatch vs matched-dtype reference"

    # Loose sanity check against the pure-f32 module semantics (bf16 operand rounding).
    ref_f32 = feedforward_ref(params, x, matmul_dtype=jnp.float32)
    assert jnp.allclose(out, ref_f32, atol=5e-2, rtol=5e-2), "mismatch vs f32 reference"

    print("KERNEL_OK")
</pallas_src>

<mosaic_0001>
module attributes {stable_mosaic.version = 11 : i64} {
  func.func @ffn_kernel(%arg0: i32, %arg1: memref<128x256xbf16, #tpu.memory_space<vmem>>, %arg2: memref<256x64xbf16, #tpu.memory_space<vmem>>, %arg3: memref<1x64xf32, #tpu.memory_space<vmem>>, %arg4: memref<64x16xbf16, #tpu.memory_space<vmem>>, %arg5: memref<1x16xf32, #tpu.memory_space<vmem>>, %arg6: memref<16x32xbf16, #tpu.memory_space<vmem>>, %arg7: memref<1x32xf32, #tpu.memory_space<vmem>>, %arg8: memref<128x32xf32, #tpu.memory_space<vmem>>) attributes {dimension_semantics = [#tpu.dimension_semantics<arbitrary>], iteration_bounds = array<i64: 1>, scalar_prefetch = 0 : i64, scratch_operands = 0 : i64, tpu.core_type = #tpu.core_type<tc>, window_params = [{transform_indices = @transform_0, window_bounds = array<i64: 128, 256>}, {pipeline_mode = #tpu.pipeline_mode<synchronous>, transform_indices = @transform_1, window_bounds = array<i64: 256, 64>}, {pipeline_mode = #tpu.pipeline_mode<synchronous>, transform_indices = @transform_2, window_bounds = array<i64: 1, 64>}, {pipeline_mode = #tpu.pipeline_mode<synchronous>, transform_indices = @transform_3, window_bounds = array<i64: 64, 16>}, {pipeline_mode = #tpu.pipeline_mode<synchronous>, transform_indices = @transform_4, window_bounds = array<i64: 1, 16>}, {pipeline_mode = #tpu.pipeline_mode<synchronous>, transform_indices = @transform_5, window_bounds = array<i64: 16, 32>}, {pipeline_mode = #tpu.pipeline_mode<synchronous>, transform_indices = @transform_6, window_bounds = array<i64: 1, 32>}, {transform_indices = @transform_7, window_bounds = array<i64: 128, 32>}]} {
    %c0 = arith.constant 0 : index
    %c0_0 = arith.constant 0 : index
    %0 = vector.load %arg1[%c0, %c0_0] : memref<128x256xbf16, #tpu.memory_space<vmem>>, vector<128x256xbf16>
    %c0_1 = arith.constant 0 : index
    %c0_2 = arith.constant 0 : index
    %1 = vector.load %arg2[%c0_1, %c0_2] : memref<256x64xbf16, #tpu.memory_space<vmem>>, vector<256x64xbf16>
    %c0_3 = arith.constant 0 : index
    %c0_4 = arith.constant 0 : index
    %2 = vector.load %arg3[%c0_3, %c0_4] : memref<1x64xf32, #tpu.memory_space<vmem>>, vector<1x64xf32>
    %cst = arith.constant dense<0.000000e+00> : vector<128x64xf32>
    %3 = tpu.matmul %0, %1, %cst {dimension_numbers = #tpu.dot_dimension_numbers<[1], [0], [0], [1], [0, 0, 1, 1], [], []>} : vector<128x256xbf16>, vector<256x64xbf16>, vector<128x64xf32> -> vector<128x64xf32>
    %4 = vector.broadcast %2 : vector<1x64xf32> to vector<128x64xf32>
    %5 = arith.addf %3, %4 : vector<128x64xf32>
    %6 = arith.negf %5 : vector<128x64xf32>
    %7 = math.exp %6 : vector<128x64xf32>
    %cst_5 = arith.constant 1.000000e+00 : f32
    %8 = vector.broadcast %cst_5 : f32 to vector<128x64xf32>
    %9 = arith.addf %8, %7 : vector<128x64xf32>
    %10 = arith.divf %8, %9 : vector<128x64xf32>
    %11 = arith.mulf %5, %10 : vector<128x64xf32>
    %c0_6 = arith.constant 0 : index
    %c0_7 = arith.constant 0 : index
    %12 = vector.load %arg4[%c0_6, %c0_7] : memref<64x16xbf16, #tpu.memory_space<vmem>>, vector<64x16xbf16>
    %c0_8 = arith.constant 0 : index
    %c0_9 = arith.constant 0 : index
    %13 = vector.load %arg5[%c0_8, %c0_9] : memref<1x16xf32, #tpu.memory_space<vmem>>, vector<1x16xf32>
    %14 = arith.truncf %11 : vector<128x64xf32> to vector<128x64xbf16>
    %cst_10 = arith.constant dense<0.000000e+00> : vector<128x16xf32>
    %15 = tpu.matmul %14, %12, %cst_10 {dimension_numbers = #tpu.dot_dimension_numbers<[1], [0], [0], [1], [0, 0, 1, 1], [], []>} : vector<128x64xbf16>, vector<64x16xbf16>, vector<128x16xf32> -> vector<128x16xf32>
    %16 = vector.broadcast %13 : vector<1x16xf32> to vector<128x16xf32>
    %17 = arith.addf %15, %16 : vector<128x16xf32>
    %18 = arith.negf %17 : vector<128x16xf32>
    %19 = math.exp %18 : vector<128x16xf32>
    %cst_11 = arith.constant 1.000000e+00 : f32
    %20 = vector.broadcast %cst_11 : f32 to vector<128x16xf32>
    %21 = arith.addf %20, %19 : vector<128x16xf32>
    %22 = arith.divf %20, %21 : vector<128x16xf32>
    %23 = arith.mulf %17, %22 : vector<128x16xf32>
    %c0_12 = arith.constant 0 : index
    %c0_13 = arith.constant 0 : index
    %24 = vector.load %arg6[%c0_12, %c0_13] : memref<16x32xbf16, #tpu.memory_space<vmem>>, vector<16x32xbf16>
    %c0_14 = arith.constant 0 : index
    %c0_15 = arith.constant 0 : index
    %25 = vector.load %arg7[%c0_14, %c0_15] : memref<1x32xf32, #tpu.memory_space<vmem>>, vector<1x32xf32>
    %26 = arith.truncf %23 : vector<128x16xf32> to vector<128x16xbf16>
    %cst_16 = arith.constant dense<0.000000e+00> : vector<128x32xf32>
    %27 = tpu.matmul %26, %24, %cst_16 {dimension_numbers = #tpu.dot_dimension_numbers<[1], [0], [0], [1], [0, 0, 1, 1], [], []>} : vector<128x16xbf16>, vector<16x32xbf16>, vector<128x32xf32> -> vector<128x32xf32>
    %28 = vector.broadcast %25 : vector<1x32xf32> to vector<128x32xf32>
    %29 = arith.addf %27, %28 : vector<128x32xf32>
    %30 = arith.negf %29 : vector<128x32xf32>
    %31 = math.exp %30 : vector<128x32xf32>
    %cst_17 = arith.constant 1.000000e+00 : f32
    %32 = vector.broadcast %cst_17 : f32 to vector<128x32xf32>
    %33 = arith.addf %32, %31 : vector<128x32xf32>
    %34 = arith.divf %32, %33 : vector<128x32xf32>
    %35 = arith.mulf %29, %34 : vector<128x32xf32>
    %c0_18 = arith.constant 0 : index
    %c0_19 = arith.constant 0 : index
    %36 = vector.load %arg8[%c0_18, %c0_19] : memref<128x32xf32, #tpu.memory_space<vmem>>, vector<128x32xf32>
    tpu.vector_store %arg8[%c0_18, %c0_19], %35 {strides = array<i32>} : memref<128x32xf32, #tpu.memory_space<vmem>>, vector<128x32xf32>,
    return
  }
  func.func @transform_0(%arg0: i32) -> (i32, i32) {
    %c0_i32 = arith.constant 0 : i32
    %c0_i32_0 = arith.constant 0 : i32
    return %arg0, %c0_i32 : i32, i32
  }
  func.func @transform_1(%arg0: i32) -> (i32, i32) {
    %c0_i32 = arith.constant 0 : i32
    %c0_i32_0 = arith.constant 0 : i32
    %c0_i32_1 = arith.constant 0 : i32
    return %c0_i32, %c0_i32_0 : i32, i32
  }
  func.func @transform_2(%arg0: i32) -> (i32, i32) {
    %c0_i32 = arith.constant 0 : i32
    %c0_i32_0 = arith.constant 0 : i32
    %c0_i32_1 = arith.constant 0 : i32
    return %c0_i32, %c0_i32_0 : i32, i32
  }
  func.func @transform_3(%arg0: i32) -> (i32, i32) {
    %c0_i32 = arith.constant 0 : i32
    %c0_i32_0 = arith.constant 0 : i32
    %c0_i32_1 = arith.constant 0 : i32
    return %c0_i32, %c0_i32_0 : i32, i32
  }
  func.func @transform_4(%arg0: i32) -> (i32, i32) {
    %c0_i32 = arith.constant 0 : i32
    %c0_i32_0 = arith.constant 0 : i32
    %c0_i32_1 = arith.constant 0 : i32
    return %c0_i32, %c0_i32_0 : i32, i32
  }
  func.func @transform_5(%arg0: i32) -> (i32, i32) {
    %c0_i32 = arith.constant 0 : i32
    %c0_i32_0 = arith.constant 0 : i32
    %c0_i32_1 = arith.constant 0 : i32
    return %c0_i32, %c0_i32_0 : i32, i32
  }
  func.func @transform_6(%arg0: i32) -> (i32, i32) {
    %c0_i32 = arith.constant 0 : i32
    %c0_i32_0 = arith.constant 0 : i32
    %c0_i32_1 = arith.constant 0 : i32
    return %c0_i32, %c0_i32_0 : i32, i32
  }
  func.func @transform_7(%arg0: i32) -> (i32, i32) {
    %c0_i32 = arith.constant 0 : i32
    %c0_i32_0 = arith.constant 0 : i32
    return %arg0, %c0_i32 : i32, i32
  }
}

module attributes {stable_mosaic.version = 11 : i64} {
  func.func @ffn_kernel(%arg0: i32, %arg1: memref<128x256xbf16, #tpu.memory_space<vmem>>, %arg2: memref<256x64xbf16, #tpu.memory_space<vmem>>, %arg3: memref<1x64xf32, #tpu.memory_space<vmem>>, %arg4: memref<64x16xbf16, #tpu.memory_space<vmem>>, %arg5: memref<1x16xf32, #tpu.memory_space<vmem>>, %arg6: memref<16x32xbf16, #tpu.memory_space<vmem>>, %arg7: memref<1x32xf32, #tpu.memory_space<vmem>>, %arg8: memref<128x32xf32, #tpu.memory_space<vmem>>) attributes {dimension_semantics = [#tpu.dimension_semantics<arbitrary>], iteration_bounds = array<i64: 1>, scalar_prefetch = 0 : i64, scratch_operands = 0 : i64, tpu.core_type = #tpu.core_type<tc>, window_params = [{transform_indices = @transform_0, window_bounds = array<i64: 128, 256>}, {pipeline_mode = #tpu.pipeline_mode<synchronous>, transform_indices = @transform_1, window_bounds = array<i64: 256, 64>}, {pipeline_mode = #tpu.pipeline_mode<synchronous>, transform_indices = @transform_2, window_bounds = array<i64: 1, 64>}, {pipeline_mode = #tpu.pipeline_mode<synchronous>, transform_indices = @transform_3, window_bounds = array<i64: 64, 16>}, {pipeline_mode = #tpu.pipeline_mode<synchronous>, transform_indices = @transform_4, window_bounds = array<i64: 1, 16>}, {pipeline_mode = #tpu.pipeline_mode<synchronous>, transform_indices = @transform_5, window_bounds = array<i64: 16, 32>}, {pipeline_mode = #tpu.pipeline_mode<synchronous>, transform_indices = @transform_6, window_bounds = array<i64: 1, 32>}, {transform_indices = @transform_7, window_bounds = array<i64: 128, 32>}]} {
    %c0 = arith.constant 0 : index
    %c0_0 = arith.constant 0 : index
    %0 = vector.load %arg1[%c0, %c0_0] : memref<128x256xbf16, #tpu.memory_space<vmem>>, vector<128x256xbf16>
    %c0_1 = arith.constant 0 : index
    %c0_2 = arith.constant 0 : index
    %1 = vector.load %arg2[%c0_1, %c0_2] : memref<256x64xbf16, #tpu.memory_space<vmem>>, vector<256x64xbf16>
    %c0_3 = arith.constant 0 : index
    %c0_4 = arith.constant 0 : index
    %2 = vector.load %arg3[%c0_3, %c0_4] : memref<1x64xf32, #tpu.memory_space<vmem>>, vector<1x64xf32>
    %cst = arith.constant dense<0.000000e+00> : vector<128x64xf32>
    %3 = tpu.matmul %0, %1, %cst {dimension_numbers = #tpu.dot_dimension_numbers<[1], [0], [0], [1], [0, 0, 1, 1], [], []>} : vector<128x256xbf16>, vector<256x64xbf16>, vector<128x64xf32> -> vector<128x64xf32>
    %4 = vector.broadcast %2 : vector<1x64xf32> to vector<128x64xf32>
    %5 = arith.addf %3, %4 : vector<128x64xf32>
    %6 = arith.negf %5 : vector<128x64xf32>
    %7 = math.exp %6 : vector<128x64xf32>
    %cst_5 = arith.constant 1.000000e+00 : f32
    %8 = vector.broadcast %cst_5 : f32 to vector<128x64xf32>
    %9 = arith.addf %8, %7 : vector<128x64xf32>
    %10 = arith.divf %8, %9 : vector<128x64xf32>
    %11 = arith.mulf %5, %10 : vector<128x64xf32>
    %c0_6 = arith.constant 0 : index
    %c0_7 = arith.constant 0 : index
    %12 = vector.load %arg4[%c0_6, %c0_7] : memref<64x16xbf16, #tpu.memory_space<vmem>>, vector<64x16xbf16>
    %c0_8 = arith.constant 0 : index
    %c0_9 = arith.constant 0 : index
    %13 = vector.load %arg5[%c0_8, %c0_9] : memref<1x16xf32, #tpu.memory_space<vmem>>, vector<1x16xf32>
    %14 = arith.truncf %11 : vector<128x64xf32> to vector<128x64xbf16>
    %cst_10 = arith.constant dense<0.000000e+00> : vector<128x16xf32>
    %15 = tpu.matmul %14, %12, %cst_10 {dimension_numbers = #tpu.dot_dimension_numbers<[1], [0], [0], [1], [0, 0, 1, 1], [], []>} : vector<128x64xbf16>, vector<64x16xbf16>, vector<128x16xf32> -> vector<128x16xf32>
    %16 = vector.broadcast %13 : vector<1x16xf32> to vector<128x16xf32>
    %17 = arith.addf %15, %16 : vector<128x16xf32>
    %18 = arith.negf %17 : vector<128x16xf32>
    %19 = math.exp %18 : vector<128x16xf32>
    %cst_11 = arith.constant 1.000000e+00 : f32
    %20 = vector.broadcast %cst_11 : f32 to vector<128x16xf32>
    %21 = arith.addf %20, %19 : vector<128x16xf32>
    %22 = arith.divf %20, %21 : vector<128x16xf32>
    %23 = arith.mulf %17, %22 : vector<128x16xf32>
    %c0_12 = arith.constant 0 : index
    %c0_13 = arith.constant 0 : index
    %24 = vector.load %arg6[%c0_12, %c0_13] : memref<16x32xbf16, #tpu.memory_space<vmem>>, vector<16x32xbf16>
    %c0_14 = arith.constant 0 : index
    %c0_15 = arith.constant 0 : index
    %25 = vector.load %arg7[%c0_14, %c0_15] : memref<1x32xf32, #tpu.memory_space<vmem>>, vector<1x32xf32>
    %26 = arith.truncf %23 : vector<128x16xf32> to vector<128x16xbf16>
    %cst_16 = arith.constant dense<0.000000e+00> : vector<128x32xf32>
    %27 = tpu.matmul %26, %24, %cst_16 {dimension_numbers = #tpu.dot_dimension_numbers<[1], [0], [0], [1], [0, 0, 1, 1], [], []>} : vector<128x16xbf16>, vector<16x32xbf16>, vector<128x32xf32> -> vector<128x32xf32>
    %28 = vector.broadcast %25 : vector<1x32xf32> to vector<128x32xf32>
    %29 = arith.addf %27, %28 : vector<128x32xf32>
    %30 = arith.negf %29 : vector<128x32xf32>
    %31 = math.exp %30 : vector<128x32xf32>
    %cst_17 = arith.constant 1.000000e+00 : f32
    %32 = vector.broadcast %cst_17 : f32 to vector<128x32xf32>
    %33 = arith.addf %32, %31 : vector<128x32xf32>
    %34 = arith.divf %32, %33 : vector<128x32xf32>
    %35 = arith.mulf %29, %34 : vector<128x32xf32>
    %c0_18 = arith.constant 0 : index
    %c0_19 = arith.constant 0 : index
    %36 = vector.load %arg8[%c0_18, %c0_19] : memref<128x32xf32, #tpu.memory_space<vmem>>, vector<128x32xf32>
    tpu.vector_store %arg8[%c0_18, %c0_19], %35 {strides = array<i32>} : memref<128x32xf32, #tpu.memory_space<vmem>>, vector<128x32xf32>,
    return
  }
  func.func @transform_0(%arg0: i32) -> (i32, i32) {
    %c0_i32 = arith.constant 0 : i32
    %c0_i32_0 = arith.constant 0 : i32
    return %arg0, %c0_i32 : i32, i32
  }
  func.func @transform_1(%arg0: i32) -> (i32, i32) {
    %c0_i32 = arith.constant 0 : i32
    %c0_i32_0 = arith.constant 0 : i32
    %c0_i32_1 = arith.constant 0 : i32
    return %c0_i32, %c0_i32_0 : i32, i32
  }
  func.func @transform_2(%arg0: i32) -> (i32, i32) {
    %c0_i32 = arith.constant 0 : i32
    %c0_i32_0 = arith.constant 0 : i32
    %c0_i32_1 = arith.constant 0 : i32
    return %c0_i32, %c0_i32_0 : i32, i32
  }
  func.func @transform_3(%arg0: i32) -> (i32, i32) {
    %c0_i32 = arith.constant 0 : i32
    %c0_i32_0 = arith.constant 0 : i32
    %c0_i32_1 = arith.constant 0 : i32
    return %c0_i32, %c0_i32_0 : i32, i32
  }
  func.func @transform_4(%arg0: i32) -> (i32, i32) {
    %c0_i32 = arith.constant 0 : i32
    %c0_i32_0 = arith.constant 0 : i32
    %c0_i32_1 = arith.constant 0 : i32
    return %c0_i32, %c0_i32_0 : i32, i32
  }
  func.func @transform_5(%arg0: i32) -> (i32, i32) {
    %c0_i32 = arith.constant 0 : i32
    %c0_i32_0 = arith.constant 0 : i32
    %c0_i32_1 = arith.constant 0 : i32
    return %c0_i32, %c0_i32_0 : i32, i32
  }
  func.func @transform_6(%arg0: i32) -> (i32, i32) {
    %c0_i32 = arith.constant 0 : i32
    %c0_i32_0 = arith.constant 0 : i32
    %c0_i32_1 = arith.constant 0 : i32
    return %c0_i32, %c0_i32_0 : i32, i32
  }
  func.func @transform_7(%arg0: i32) -> (i32, i32) {
    %c0_i32 = arith.constant 0 : i32
    %c0_i32_0 = arith.constant 0 : i32
    return %arg0, %c0_i32 : i32, i32
  }
}

</mosaic_0001>

<llo_original>
// kernel: tpu_custom_call.1
$region0: #{tpu_custom_call.1}
  #allocation0 [shape = 'u32[]', space=smem, size = 0x4, offset = 0x4, fixed_abs, tag = 'smem constant byte address 0x4 - core index']
  #allocation1 [shape = 'u32[144,128]{1,0:T(1,128)}', space=vmem, size = 0x12000, scoped, tag = 'internal scratch']
  %s0 = inlined_call_operand.vmem [shape: bf16[128,256], index: 0, kind: input, shape index: {}]
  %s1 = inlined_call_operand.vmem [shape: bf16[256,64], index: 1, kind: input, shape index: {}]
  %s2 = inlined_call_operand.vmem [shape: f32[1,64], index: 2, kind: input, shape index: {}]
  %s3 = inlined_call_operand.vmem [shape: bf16[64,16], index: 3, kind: input, shape index: {}]
  %s4 = inlined_call_operand.vmem [shape: f32[1,16], index: 4, kind: input, shape index: {}]
  %s5 = inlined_call_operand.vmem [shape: bf16[16,32], index: 5, kind: input, shape index: {}]
  %s6 = inlined_call_operand.vmem [shape: f32[1,32], index: 6, kind: input, shape index: {}]
  %s7 = inlined_call_operand.vmem [shape: f32[128,32], index: 7, kind: output, shape index: {}]
  %s8 = sld [smem:[#allocation0]]
  $region38: #{tpu_custom_call.1} parent=0
    _
  %s10 = ssub.s32 1, %s8
  %s11 = scalar_select 0, %s10, %s8
  // Predicated region
  $region2: #{tpu_custom_call.1} parent=0 // pred_check
    _
  $region3: #{tpu_custom_call.1} parent=0 // pred_check_branch
    %13 = sbr.rel (0) target = $region5
  $region4: #{tpu_custom_call.1} parent=0 // pred_region
    _
  $region5: #{tpu_custom_call.1} parent=0 // pred_fallthru
    _
  // Predicated region
  $region6: #{tpu_custom_call.1} parent=0 // pred_check
    _
  $region7: #{tpu_custom_call.1} parent=0 // pred_check_branch
    %15 = sbr.rel (0) target = $region9
  $region8: #{tpu_custom_call.1} parent=0 // pred_region
    _
  $region9: #{tpu_custom_call.1} parent=0 // pred_fallthru
    _
  // Predicated region
  $region10: #{tpu_custom_call.1} parent=0 // pred_check
    _
  $region11: #{tpu_custom_call.1} parent=0 // pred_check_branch
    %17 = sbr.rel (0) target = $region13
  $region12: #{tpu_custom_call.1} parent=0 // pred_region
    _
  $region13: #{tpu_custom_call.1} parent=0 // pred_fallthru
    _
  // Predicated region
  $region14: #{tpu_custom_call.1} parent=0 // pred_check
    _
  $region15: #{tpu_custom_call.1} parent=0 // pred_check_branch
    %19 = sbr.rel (0) target = $region17
  $region16: #{tpu_custom_call.1} parent=0 // pred_region
    _
  $region17: #{tpu_custom_call.1} parent=0 // pred_fallthru
    _
  // Predicated region
  $region18: #{tpu_custom_call.1} parent=0 // pred_check
    _
  $region19: #{tpu_custom_call.1} parent=0 // pred_check_branch
    %21 = sbr.rel (0) target = $region21
  $region20: #{tpu_custom_call.1} parent=0 // pred_region
    _
  $region21: #{tpu_custom_call.1} parent=0 // pred_fallthru
    _
  // Predicated region
  $region22: #{tpu_custom_call.1} parent=0 // pred_check
    _
  $region23: #{tpu_custom_call.1} parent=0 // pred_check_branch
    %23 = sbr.rel (0) target = $region25
  $region24: #{tpu_custom_call.1} parent=0 // pred_region
    _
  $region25: #{tpu_custom_call.1} parent=0 // pred_fallthru
    _
  // Predicated region
  $region26: #{tpu_custom_call.1} parent=0 // pred_check
    _
  $region27: #{tpu_custom_call.1} parent=0 // pred_check_branch
    %25 = sbr.rel (0) target = $region29
  $region28: #{tpu_custom_call.1} parent=0 // pred_region
    _
  $region29: #{tpu_custom_call.1} parent=0 // pred_fallthru
    _
  %v27 = vld [vmem:[%s0] sm:$0xff]
  %v28 = vld [vmem:[%s0 + $0x8] sm:$0xff]
  %v29 = vld [vmem:[%s0 + $0x10] sm:$0xff]
  %v30 = vld [vmem:[%s0 + $0x18] sm:$0xff]
  %v31 = vld [vmem:[%s0 + $0x20] sm:$0xff]
  %v32 = vld [vmem:[%s0 + $0x28] sm:$0xff]
  %v33 = vld [vmem:[%s0 + $0x30] sm:$0xff]
  %v34 = vld [vmem:[%s0 + $0x38] sm:$0xff]
  %v35 = vld [vmem:[%s0 + $0x40] sm:$0xff]
  %v36 = vld [vmem:[%s0 + $0x48] sm:$0xff]
  %v37 = vld [vmem:[%s0 + $0x50] sm:$0xff]
  %v38 = vld [vmem:[%s0 + $0x58] sm:$0xff]
  %v39 = vld [vmem:[%s0 + $0x60] sm:$0xff]
  %v40 = vld [vmem:[%s0 + $0x68] sm:$0xff]
  %v41 = vld [vmem:[%s0 + $0x70] sm:$0xff]
  %v42 = vld [vmem:[%s0 + $0x78] sm:$0xff]
  %v43 = vld [vmem:[%s1] sm:$0xf]
  %v44 = vld [vmem:[%s1 + $0x4] sm:$0xf]
  %v45 = vld [vmem:[%s1 + $0x8] sm:$0xf]
  %v46 = vld [vmem:[%s1 + $0xc] sm:$0xf]
  %v47 = vld [vmem:[%s1 + $0x10] sm:$0xf]
  %v48 = vld [vmem:[%s1 + $0x14] sm:$0xf]
  %v49 = vld [vmem:[%s1 + $0x18] sm:$0xf]
  %v50 = vld [vmem:[%s1 + $0x1c] sm:$0xf]
  %v51 = vld [vmem:[%s1 + $0x20] sm:$0xf]
  %v52 = vld [vmem:[%s1 + $0x24] sm:$0xf]
  %v53 = vld [vmem:[%s1 + $0x28] sm:$0xf]
  %v54 = vld [vmem:[%s1 + $0x2c] sm:$0xf]
  %v55 = vld [vmem:[%s1 + $0x30] sm:$0xf]
  %v56 = vld [vmem:[%s1 + $0x34] sm:$0xf]
  %v57 = vld [vmem:[%s1 + $0x38] sm:$0xf]
  %v58 = vld [vmem:[%s1 + $0x3c] sm:$0xf]
  %v59 = vld [vmem:[%s1 + $0x40] sm:$0xf]
  %v60 = vld [vmem:[%s1 + $0x44] sm:$0xf]
  %v61 = vld [vmem:[%s1 + $0x48] sm:$0xf]
  %v62 = vld [vmem:[%s1 + $0x4c] sm:$0xf]
  %v63 = vld [vmem:[%s1 + $0x50] sm:$0xf]
  %v64 = vld [vmem:[%s1 + $0x54] sm:$0xf]
  %v65 = vld [vmem:[%s1 + $0x58] sm:$0xf]
  %v66 = vld [vmem:[%s1 + $0x5c] sm:$0xf]
  %v67 = vld [vmem:[%s1 + $0x60] sm:$0xf]
  %v68 = vld [vmem:[%s1 + $0x64] sm:$0xf]
  %v69 = vld [vmem:[%s1 + $0x68] sm:$0xf]
  %v70 = vld [vmem:[%s1 + $0x6c] sm:$0xf]
  %v71 = vld [vmem:[%s1 + $0x70] sm:$0xf]
  %v72 = vld [vmem:[%s1 + $0x74] sm:$0xf]
  %v73 = vld [vmem:[%s1 + $0x78] sm:$0xf]
  %v74 = vld [vmem:[%s1 + $0x7c] sm:$0xf]
  %v75 = vld [vmem:[%s2] sm:$0x1]
  %v77 = vlaneseq
  %v78 = vshrl.u32 %v77, 7
  %v79 = vsub.s32 0, %v78
  %v80 = vrot.slane %v75, %v79
  %v98 = vunpack.c.l.b16 %v27
  %v99 = vunpack.c.h.b16 %v27
  %v100 = vunpack.c.l.b16 %v28
  %v101 = vunpack.c.h.b16 %v28
  %v102 = vunpack.c.l.b16 %v29
  %v103 = vunpack.c.h.b16 %v29
  %v104 = vunpack.c.l.b16 %v30
  %v105 = vunpack.c.h.b16 %v30
  %v106 = vunpack.c.l.b16 %v31
  %v107 = vunpack.c.h.b16 %v31
  %v108 = vunpack.c.l.b16 %v32
  %v109 = vunpack.c.h.b16 %v32
  %v110 = vunpack.c.l.b16 %v33
  %v111 = vunpack.c.h.b16 %v33
  %v112 = vunpack.c.l.b16 %v34
  %v113 = vunpack.c.h.b16 %v34
  %v114 = vunpack.c.l.b16 %v35
  %v115 = vunpack.c.h.b16 %v35
  %v116 = vunpack.c.l.b16 %v36
  %v117 = vunpack.c.h.b16 %v36
  %v118 = vunpack.c.l.b16 %v37
  %v119 = vunpack.c.h.b16 %v37
  %v120 = vunpack.c.l.b16 %v38
  %v121 = vunpack.c.h.b16 %v38
  %v122 = vunpack.c.l.b16 %v39
  %v123 = vunpack.c.h.b16 %v39
  %v124 = vunpack.c.l.b16 %v40
  %v125 = vunpack.c.h.b16 %v40
  %v126 = vunpack.c.l.b16 %v41
  %v127 = vunpack.c.h.b16 %v41
  %v128 = vunpack.c.l.b16 %v42
  %v129 = vunpack.c.h.b16 %v42
  %v130 = vpack.c.b16 %v100, %v98
  %v131 = vpack.c.b16 %v101, %v99
  %v132 = vpack.c.b16 %v104, %v102
  %v133 = vpack.c.b16 %v105, %v103
  %v134 = vpack.c.b16 %v108, %v106
  %v135 = vpack.c.b16 %v109, %v107
  %v136 = vpack.c.b16 %v112, %v110
  %v137 = vpack.c.b16 %v113, %v111
  %v138 = vpack.c.b16 %v116, %v114
  %v139 = vpack.c.b16 %v117, %v115
  %v140 = vpack.c.b16 %v120, %v118
  %v141 = vpack.c.b16 %v121, %v119
  %v142 = vpack.c.b16 %v124, %v122
  %v143 = vpack.c.b16 %v125, %v123
  %v144 = vpack.c.b16 %v128, %v126
  %v145 = vpack.c.b16 %v129, %v127
  %v194 = vunpack.c.l.b16 %v43
  %v195 = vunpack.c.l.b16 %v44
  %v196 = vunpack.c.l.b16 %v45
  %v197 = vunpack.c.l.b16 %v46
  %v198 = vunpack.c.l.b16 %v47
  %v199 = vunpack.c.l.b16 %v48
  %v200 = vunpack.c.l.b16 %v49
  %v201 = vunpack.c.l.b16 %v50
  %v202 = vunpack.c.l.b16 %v51
  %v203 = vunpack.c.l.b16 %v52
  %v204 = vunpack.c.l.b16 %v53
  %v205 = vunpack.c.l.b16 %v54
  %v206 = vunpack.c.l.b16 %v55
  %v207 = vunpack.c.l.b16 %v56
  %v208 = vunpack.c.l.b16 %v57
  %v209 = vunpack.c.l.b16 %v58
  %v210 = vunpack.c.l.b16 %v59
  %v211 = vunpack.c.l.b16 %v60
  %v212 = vunpack.c.l.b16 %v61
  %v213 = vunpack.c.l.b16 %v62
  %v214 = vunpack.c.l.b16 %v63
  %v215 = vunpack.c.l.b16 %v64
  %v216 = vunpack.c.l.b16 %v65
  %v217 = vunpack.c.l.b16 %v66
  %v218 = vunpack.c.l.b16 %v67
  %v219 = vunpack.c.l.b16 %v68
  %v220 = vunpack.c.l.b16 %v69
  %v221 = vunpack.c.l.b16 %v70
  %v222 = vunpack.c.l.b16 %v71
  %v223 = vunpack.c.l.b16 %v72
  %v224 = vunpack.c.l.b16 %v73
  %v225 = vunpack.c.l.b16 %v74
  %v226 = vpack.c.b16 %v195, %v194
  %v227 = vpack.c.b16 %v197, %v196
  %v228 = vpack.c.b16 %v199, %v198
  %v229 = vpack.c.b16 %v201, %v200
  %v230 = vpack.c.b16 %v203, %v202
  %v231 = vpack.c.b16 %v205, %v204
  %v232 = vpack.c.b16 %v207, %v206
  %v233 = vpack.c.b16 %v209, %v208
  %v234 = vpack.c.b16 %v211, %v210
  %v235 = vpack.c.b16 %v213, %v212
  %v236 = vpack.c.b16 %v215, %v214
  %v237 = vpack.c.b16 %v217, %v216
  %v238 = vpack.c.b16 %v219, %v218
  %v239 = vpack.c.b16 %v221, %v220
  %v240 = vpack.c.b16 %v223, %v222
  %v241 = vpack.c.b16 %v225, %v224
  %258 = vmatprep.subr.bf16.mxu0 0
  %259 = vmatpush1.bf16.msra.mxu0 %v226
  %260 = vmatprep.subr.bf16.mxu0 0
  %261 = vmatpush1.bf16.msra.mxu0 %v227
  %262 = vmatprep.subr.bf16.mxu0 0
  %263 = vmatpush1.bf16.msra.mxu0 %v228
  %264 = vmatprep.subr.bf16.mxu0 0
  %265 = vmatpush1.bf16.msra.mxu0 %v229
  %266 = vmatprep.subr.bf16.mxu0 0
  %267 = vmatpush1.bf16.msra.mxu0 %v230
  %268 = vmatprep.subr.bf16.mxu0 0
  %269 = vmatpush1.bf16.msra.mxu0 %v231
  %270 = vmatprep.subr.bf16.mxu0 0
  %271 = vmatpush1.bf16.msra.mxu0 %v232
  %272 = vmatprep.subr.bf16.mxu0 0
  %273 = vmatpush1.bf16.msra.mxu0 %v233
  %274 = vmatprep.subr.bf16.mxu0 0
  %275 = vmatpush1.bf16.msra.mxu0 %v234
  %276 = vmatprep.subr.bf16.mxu0 0
  %277 = vmatpush1.bf16.msra.mxu0 %v235
  %278 = vmatprep.subr.bf16.mxu0 0
  %279 = vmatpush1.bf16.msra.mxu0 %v236
  %280 = vmatprep.subr.bf16.mxu0 0
  %281 = vmatpush1.bf16.msra.mxu0 %v237
  %282 = vmatprep.subr.bf16.mxu0 0
  %283 = vmatpush1.bf16.msra.mxu0 %v238
  %284 = vmatprep.subr.bf16.mxu0 0
  %285 = vmatpush1.bf16.msra.mxu0 %v239
  %286 = vmatprep.subr.bf16.mxu0 0
  %287 = vmatpush1.bf16.msra.mxu0 %v240
  %288 = vmatprep.subr.bf16.mxu0 0
  %289 = vmatpush1.bf16.msra.mxu0 %v241
  %290 = vmatprep.mubr.bf16.mxu0 %v131
  %291 = vmatmul.mubr.bf16.gmra.mrb[0].mxu0 %v130
  %v292 = vpop.f32.mrb[0].mxu0
  %v293 = vadd.f32 %v80, %v292
  %v294 = vpop.f32.mrb[0].mxu0
  %v295 = vpop.f32.mrb[0].mxu0
  %v296 = vadd.f32 %v80, %v295
  %v297 = vpop.f32.mrb[0].mxu0
  %298 = vmatprep.mubr.bf16.mxu0 %v133
  %299 = vmatmul.mubr.bf16.gmra.mrb[0].mxu0 %v132
  %v300 = vpop.f32.mrb[0].mxu0
  %v301 = vadd.f32 %v80, %v300
  %v302 = vpop.f32.mrb[0].mxu0
  %v303 = vpop.f32.mrb[0].mxu0
  %v304 = vadd.f32 %v80, %v303
  %v305 = vpop.f32.mrb[0].mxu0
  %306 = vmatprep.mubr.bf16.mxu0 %v135
  %307 = vmatmul.mubr.bf16.gmra.mrb[0].mxu0 %v134
  %v308 = vpop.f32.mrb[0].mxu0
  %v309 = vadd.f32 %v80, %v308
  %v310 = vpop.f32.mrb[0].mxu0
  %v311 = vpop.f32.mrb[0].mxu0
  %v312 = vadd.f32 %v80, %v311
  %v313 = vpop.f32.mrb[0].mxu0
  %314 = vmatprep.mubr.bf16.mxu0 %v137
  %315 = vmatmul.mubr.bf16.gmra.mrb[0].mxu0 %v136
  %v316 = vpop.f32.mrb[0].mxu0
  %v317 = vadd.f32 %v80, %v316
  %v318 = vpop.f32.mrb[0].mxu0
  %v319 = vpop.f32.mrb[0].mxu0
  %v320 = vadd.f32 %v80, %v319
  %v321 = vpop.f32.mrb[0].mxu0
  %322 = vmatprep.mubr.bf16.mxu0 %v139
  %323 = vmatmul.mubr.bf16.gmra.mrb[0].mxu0 %v138
  %v324 = vpop.f32.mrb[0].mxu0
  %v325 = vadd.f32 %v80, %v324
  %v326 = vpop.f32.mrb[0].mxu0
  %v327 = vpop.f32.mrb[0].mxu0
  %v328 = vadd.f32 %v80, %v327
  %v329 = vpop.f32.mrb[0].mxu0
  %330 = vmatprep.mubr.bf16.mxu0 %v141
  %331 = vmatmul.mubr.bf16.gmra.mrb[0].mxu0 %v140
  %v332 = vpop.f32.mrb[0].mxu0
  %v333 = vadd.f32 %v80, %v332
  %v334 = vpop.f32.mrb[0].mxu0
  %v335 = vpop.f32.mrb[0].mxu0
  %v336 = vadd.f32 %v80, %v335
  %v337 = vpop.f32.mrb[0].mxu0
  %338 = vmatprep.mubr.bf16.mxu0 %v143
  %339 = vmatmul.mubr.bf16.gmra.mrb[0].mxu0 %v142
  %v340 = vpop.f32.mrb[0].mxu0
  %v341 = vadd.f32 %v80, %v340
  %v342 = vpop.f32.mrb[0].mxu0
  %v343 = vpop.f32.mrb[0].mxu0
  %v344 = vadd.f32 %v80, %v343
  %v345 = vpop.f32.mrb[0].mxu0
  %346 = vmatprep.mubr.bf16.mxu0 %v145
  %347 = vmatmul.mubr.bf16.gmra.mrb[0].mxu0 %v144
  %v348 = vpop.f32.mrb[0].mxu0
  %v349 = vadd.f32 %v80, %v348
  %v350 = vpop.f32.mrb[0].mxu0
  %v351 = vpop.f32.mrb[0].mxu0
  %v352 = vadd.f32 %v80, %v351
  %v353 = vpop.f32.mrb[0].mxu0
  %354 = vdwg.mxu0
  %v355 = vxor.u32 %v293, 2147483648
  %v356 = vxor.u32 %v296, 2147483648
  %v357 = vxor.u32 %v301, 2147483648
  %v358 = vxor.u32 %v304, 2147483648
  %v359 = vxor.u32 %v309, 2147483648
  %v360 = vxor.u32 %v312, 2147483648
  %v361 = vxor.u32 %v317, 2147483648
  %v362 = vxor.u32 %v320, 2147483648
  %v363 = vxor.u32 %v325, 2147483648
  %v364 = vxor.u32 %v328, 2147483648
  %v365 = vxor.u32 %v333, 2147483648
  %v366 = vxor.u32 %v336, 2147483648
  %v367 = vxor.u32 %v341, 2147483648
  %v368 = vxor.u32 %v344, 2147483648
  %v369 = vxor.u32 %v349, 2147483648
  %v370 = vxor.u32 %v352, 2147483648
  %v371 = vmul.f32 %v355, 1.442695
  %v372 = vpow.pop %v371
  %v373 = vmul.f32 %v356, 1.442695
  %v374 = vpow.pop %v373
  %v375 = vmul.f32 %v357, 1.442695
  %v376 = vpow.pop %v375
  %v377 = vmul.f32 %v358, 1.442695
  %v378 = vpow.pop %v377
  %v379 = vmul.f32 %v359, 1.442695
  %v380 = vpow.pop %v379
  %v381 = vmul.f32 %v360, 1.442695
  %v382 = vpow.pop %v381
  %v383 = vmul.f32 %v361, 1.442695
  %v384 = vpow.pop %v383
  %v385 = vmul.f32 %v362, 1.442695
  %v386 = vpow.pop %v385
  %v387 = vmul.f32 %v363, 1.442695
  %v388 = vpow.pop %v387
  %v389 = vmul.f32 %v364, 1.442695
  %v390 = vpow.pop %v389
  %v391 = vmul.f32 %v365, 1.442695
  %v392 = vpow.pop %v391
  %v393 = vmul.f32 %v366, 1.442695
  %v394 = vpow.pop %v393
  %v395 = vmul.f32 %v367, 1.442695
  %v396 = vpow.pop %v395
  %v397 = vmul.f32 %v368, 1.442695
  %v398 = vpow.pop %v397
  %v399 = vmul.f32 %v369, 1.442695
  %v400 = vpow.pop %v399
  %v401 = vmul.f32 %v370, 1.442695
  %v402 = vpow.pop %v401
  %v403 = vadd.f32 %v372, 1.0
  %v404 = vadd.f32 %v374, 1.0
  %v405 = vadd.f32 %v376, 1.0
  %v406 = vadd.f32 %v378, 1.0
  %v407 = vadd.f32 %v380, 1.0
  %v408 = vadd.f32 %v382, 1.0
  %v409 = vadd.f32 %v384, 1.0
  %v410 = vadd.f32 %v386, 1.0
  %v411 = vadd.f32 %v388, 1.0
  %v412 = vadd.f32 %v390, 1.0
  %v413 = vadd.f32 %v392, 1.0
  %v414 = vadd.f32 %v394, 1.0
  %v415 = vadd.f32 %v396, 1.0
  %v416 = vadd.f32 %v398, 1.0
  %v417 = vadd.f32 %v400, 1.0
  %v418 = vadd.f32 %v402, 1.0
  %v419 = vrcp.pop %v403
  %v420 = vmul.f32 1.0, %v419
  %v421 = vrcp.pop %v404
  %v422 = vmul.f32 1.0, %v421
  %v423 = vrcp.pop %v405
  %v424 = vmul.f32 1.0, %v423
  %v425 = vrcp.pop %v406
  %v426 = vmul.f32 1.0, %v425
  %v427 = vrcp.pop %v407
  %v428 = vmul.f32 1.0, %v427
  %v429 = vrcp.pop %v408
  %v430 = vmul.f32 1.0, %v429
  %v431 = vrcp.pop %v409
  %v432 = vmul.f32 1.0, %v431
  %v433 = vrcp.pop %v410
  %v434 = vmul.f32 1.0, %v433
  %v435 = vrcp.pop %v411
  %v436 = vmul.f32 1.0, %v435
  %v437 = vrcp.pop %v412
  %v438 = vmul.f32 1.0, %v437
  %v439 = vrcp.pop %v413
  %v440 = vmul.f32 1.0, %v439
  %v441 = vrcp.pop %v414
  %v442 = vmul.f32 1.0, %v441
  %v443 = vrcp.pop %v415
  %v444 = vmul.f32 1.0, %v443
  %v445 = vrcp.pop %v416
  %v446 = vmul.f32 1.0, %v445
  %v447 = vrcp.pop %v417
  %v448 = vmul.f32 1.0, %v447
  %v449 = vrcp.pop %v418
  %v450 = vmul.f32 1.0, %v449
  %v451 = vmul.f32 %v293, %v420
  %v452 = vmul.f32 %v296, %v422
  %v453 = vmul.f32 %v301, %v424
  %v454 = vmul.f32 %v304, %v426
  %v455 = vmul.f32 %v309, %v428
  %v456 = vmul.f32 %v312, %v430
  %v457 = vmul.f32 %v317, %v432
  %v458 = vmul.f32 %v320, %v434
  %v459 = vmul.f32 %v325, %v436
  %v460 = vmul.f32 %v328, %v438
  %v461 = vmul.f32 %v333, %v440
  %v462 = vmul.f32 %v336, %v442
  %v463 = vmul.f32 %v341, %v444
  %v464 = vmul.f32 %v344, %v446
  %v465 = vmul.f32 %v349, %v448
  %v466 = vmul.f32 %v352, %v450
  %v467 = vld [vmem:[%s3] sm:$0xf]
  %v468 = vld [vmem:[%s3 + $0x4] sm:$0xf]
  %v469 = vld [vmem:[%s3 + $0x8] sm:$0xf]
  %v470 = vld [vmem:[%s3 + $0xc] sm:$0xf]
  %v471 = vld [vmem:[%s3 + $0x10] sm:$0xf]
  %v472 = vld [vmem:[%s3 + $0x14] sm:$0xf]
  %v473 = vld [vmem:[%s3 + $0x18] sm:$0xf]
  %v474 = vld [vmem:[%s3 + $0x1c] sm:$0xf]
  %v475 = vld [vmem:[%s4] sm:$0x1]
  %v476 = vpack.c.bf16 %v452, %v451
  %v477 = vpack.c.bf16 %v454, %v453
  %v478 = vpack.c.bf16 %v456, %v455
  %v479 = vpack.c.bf16 %v458, %v457
  %v480 = vpack.c.bf16 %v460, %v459
  %v481 = vpack.c.bf16 %v462, %v461
  %v482 = vpack.c.bf16 %v464, %v463
  %v483 = vpack.c.bf16 %v466, %v465
  %v485 = vlaneseq
  %v486 = vshrl.u32 %v485, 7
  %v487 = vsub.s32 0, %v486
  %v488 = vrot.slane %v475, %v487
  %v498 = vunpack.c.l.b16 %v467
  %v499 = vunpack.c.l.b16 %v468
  %v500 = vunpack.c.l.b16 %v469
  %v501 = vunpack.c.l.b16 %v470
  %v502 = vunpack.c.l.b16 %v471
  %v503 = vunpack.c.l.b16 %v472
  %v504 = vunpack.c.l.b16 %v473
  %v505 = vunpack.c.l.b16 %v474
  %v506 = vpack.c.b16 %v499, %v498
  %v507 = vpack.c.b16 %v501, %v500
  %v508 = vpack.c.b16 %v503, %v502
  %v509 = vpack.c.b16 %v505, %v504
  %vm514 = vcmask 523264
  %v516 = vsel %vm514, %v476, 0
  %v519 = vsel %vm514, %v477, 0
  %v522 = vsel %vm514, %v478, 0
  %v525 = vsel %vm514, %v479, 0
  %v528 = vsel %vm514, %v480, 0
  %v531 = vsel %vm514, %v481, 0
  %v534 = vsel %vm514, %v482, 0
  %v537 = vsel %vm514, %v483, 0
  %539 = vmatprep.subr.bf16.mxu0 0
  %540 = vmatpush1.bf16.msra.mxu0 %v506
  %541 = vmatprep.subr.bf16.mxu0 0
  %542 = vmatpush1.bf16.msra.mxu0 %v507
  %543 = vmatprep.subr.bf16.mxu0 0
  %544 = vmatpush1.bf16.msra.mxu0 %v508
  %545 = vmatprep.subr.bf16.mxu0 0
  %546 = vmatpush1.bf16.msra.mxu0 %v509
  %547 = vmatprep.subr.bf16.mxu0 0
  %548 = vmatpush1.bf16.msra.mxu0 0
  %549 = vmatprep.subr.bf16.mxu0 0
  %550 = vmatpush1.bf16.msra.mxu0 0
  %551 = vmatprep.subr.bf16.mxu0 0
  %552 = vmatpush1.bf16.msra.mxu0 0
  %553 = vmatprep.subr.bf16.mxu0 0
  %554 = vmatpush1.bf16.msra.mxu0 0
  %555 = vmatprep.subr.bf16.mxu0 0
  %556 = vmatpush1.bf16.msra.mxu0 0
  %557 = vmatprep.subr.bf16.mxu0 0
  %558 = vmatpush1.bf16.msra.mxu0 0
  %559 = vmatprep.subr.bf16.mxu0 0
  %560 = vmatpush1.bf16.msra.mxu0 0
  %561 = vmatprep.subr.bf16.mxu0 0
  %562 = vmatpush1.bf16.msra.mxu0 0
  %563 = vmatprep.subr.bf16.mxu0 0
  %564 = vmatpush1.bf16.msra.mxu0 0
  %565 = vmatprep.subr.bf16.mxu0 0
  %566 = vmatpush1.bf16.msra.mxu0 0
  %567 = vmatprep.subr.bf16.mxu0 0
  %568 = vmatpush1.bf16.msra.mxu0 0
  %569 = vmatprep.subr.bf16.mxu0 0
  %570 = vmatpush1.bf16.msra.mxu0 0
  %571 = vmatprep.mubr.bf16.mxu0 0
  %572 = vmatmul.mubr.bf16.gmra.mrb[0].mxu0 %v516
  %v573 = vpop.f32.mrb[0].mxu0
  %v574 = vadd.f32 %v488, %v573
  %v575 = vpop.f32.mrb[0].mxu0
  %v576 = vpop.f32.mrb[0].mxu0
  %v577 = vadd.f32 %v488, %v576
  %v578 = vpop.f32.mrb[0].mxu0
  %579 = vmatprep.mubr.bf16.mxu0 0
  %580 = vmatmul.mubr.bf16.gmra.mrb[0].mxu0 %v519
  %v581 = vpop.f32.mrb[0].mxu0
  %v582 = vadd.f32 %v488, %v581
  %v583 = vpop.f32.mrb[0].mxu0
  %v584 = vpop.f32.mrb[0].mxu0
  %v585 = vadd.f32 %v488, %v584
  %v586 = vpop.f32.mrb[0].mxu0
  %587 = vmatprep.mubr.bf16.mxu0 0
  %588 = vmatmul.mubr.bf16.gmra.mrb[0].mxu0 %v522
  %v589 = vpop.f32.mrb[0].mxu0
  %v590 = vadd.f32 %v488, %v589
  %v591 = vpop.f32.mrb[0].mxu0
  %v592 = vpop.f32.mrb[0].mxu0
  %v593 = vadd.f32 %v488, %v592
  %v594 = vpop.f32.mrb[0].mxu0
  %595 = vmatprep.mubr.bf16.mxu0 0
  %596 = vmatmul.mubr.bf16.gmra.mrb[0].mxu0 %v525
  %v597 = vpop.f32.mrb[0].mxu0
  %v598 = vadd.f32 %v488, %v597
  %v599 = vpop.f32.mrb[0].mxu0
  %v600 = vpop.f32.mrb[0].mxu0
  %v601 = vadd.f32 %v488, %v600
  %v602 = vpop.f32.mrb[0].mxu0
  %603 = vmatprep.mubr.bf16.mxu0 0
  %604 = vmatmul.mubr.bf16.gmra.mrb[0].mxu0 %v528
  %v605 = vpop.f32.mrb[0].mxu0
  %v606 = vadd.f32 %v488, %v605
  %v607 = vpop.f32.mrb[0].mxu0
  %v608 = vpop.f32.mrb[0].mxu0
  %v609 = vadd.f32 %v488, %v608
  %v610 = vpop.f32.mrb[0].mxu0
  %611 = vmatprep.mubr.bf16.mxu0 0
  %612 = vmatmul.mubr.bf16.gmra.mrb[0].mxu0 %v531
  %v613 = vpop.f32.mrb[0].mxu0
  %v614 = vadd.f32 %v488, %v613
  %v615 = vpop.f32.mrb[0].mxu0
  %v616 = vpop.f32.mrb[0].mxu0
  %v617 = vadd.f32 %v488, %v616
  %v618 = vpop.f32.mrb[0].mxu0
  %619 = vmatprep.mubr.bf16.mxu0 0
  %620 = vmatmul.mubr.bf16.gmra.mrb[0].mxu0 %v534
  %v621 = vpop.f32.mrb[0].mxu0
  %v622 = vadd.f32 %v488, %v621
  %v623 = vpop.f32.mrb[0].mxu0
  %v624 = vpop.f32.mrb[0].mxu0
  %v625 = vadd.f32 %v488, %v624
  %v626 = vpop.f32.mrb[0].mxu0
  %627 = vmatprep.mubr.bf16.mxu0 0
  %628 = vmatmul.mubr.bf16.gmra.mrb[0].mxu0 %v537
  %v629 = vpop.f32.mrb[0].mxu0
  %v630 = vadd.f32 %v488, %v629
  %v631 = vpop.f32.mrb[0].mxu0
  %v632 = vpop.f32.mrb[0].mxu0
  %v633 = vadd.f32 %v488, %v632
  %v634 = vpop.f32.mrb[0].mxu0
  %635 = vdwg.mxu0
  %v636 = vxor.u32 %v574, 2147483648
  %v637 = vxor.u32 %v577, 2147483648
  %v638 = vxor.u32 %v582, 2147483648
  %v639 = vxor.u32 %v585, 2147483648
  %v640 = vxor.u32 %v590, 2147483648
  %v641 = vxor.u32 %v593, 2147483648
  %v642 = vxor.u32 %v598, 2147483648
  %v643 = vxor.u32 %v601, 2147483648
  %v644 = vxor.u32 %v606, 2147483648
  %v645 = vxor.u32 %v609, 2147483648
  %v646 = vxor.u32 %v614, 2147483648
  %v647 = vxor.u32 %v617, 2147483648
  %v648 = vxor.u32 %v622, 2147483648
  %v649 = vxor.u32 %v625, 2147483648
  %v650 = vxor.u32 %v630, 2147483648
  %v651 = vxor.u32 %v633, 2147483648
  %v652 = vmul.f32 %v636, 1.442695
  %v653 = vpow.pop %v652
  %v654 = vmul.f32 %v637, 1.442695
  %v655 = vpow.pop %v654
  %v656 = vmul.f32 %v638, 1.442695
  %v657 = vpow.pop %v656
  %v658 = vmul.f32 %v639, 1.442695
  %v659 = vpow.pop %v658
  %v660 = vmul.f32 %v640, 1.442695
  %v661 = vpow.pop %v660
  %v662 = vmul.f32 %v641, 1.442695
  %v663 = vpow.pop %v662
  %v664 = vmul.f32 %v642, 1.442695
  %v665 = vpow.pop %v664
  %v666 = vmul.f32 %v643, 1.442695
  %v667 = vpow.pop %v666
  %v668 = vmul.f32 %v644, 1.442695
  %v669 = vpow.pop %v668
  %v670 = vmul.f32 %v645, 1.442695
  %v671 = vpow.pop %v670
  %v672 = vmul.f32 %v646, 1.442695
  %v673 = vpow.pop %v672
  %v674 = vmul.f32 %v647, 1.442695
  %v675 = vpow.pop %v674
  %v676 = vmul.f32 %v648, 1.442695
  %v677 = vpow.pop %v676
  %v678 = vmul.f32 %v649, 1.442695
  %v679 = vpow.pop %v678
  %v680 = vmul.f32 %v650, 1.442695
  %v681 = vpow.pop %v680
  %v682 = vmul.f32 %v651, 1.442695
  %v683 = vpow.pop %v682
  %v684 = vadd.f32 %v653, 1.0
  %v685 = vadd.f32 %v655, 1.0
  %v686 = vadd.f32 %v657, 1.0
  %v687 = vadd.f32 %v659, 1.0
  %v688 = vadd.f32 %v661, 1.0
  %v689 = vadd.f32 %v663, 1.0
  %v690 = vadd.f32 %v665, 1.0
  %v691 = vadd.f32 %v667, 1.0
  %v692 = vadd.f32 %v669, 1.0
  %v693 = vadd.f32 %v671, 1.0
  %v694 = vadd.f32 %v673, 1.0
  %v695 = vadd.f32 %v675, 1.0
  %v696 = vadd.f32 %v677, 1.0
  %v697 = vadd.f32 %v679, 1.0
  %v698 = vadd.f32 %v681, 1.0
  %v699 = vadd.f32 %v683, 1.0
  %v700 = vrcp.pop %v684
  %v701 = vmul.f32 1.0, %v700
  %v702 = vrcp.pop %v685
  %v703 = vmul.f32 1.0, %v702
  %v704 = vrcp.pop %v686
  %v705 = vmul.f32 1.0, %v704
  %v706 = vrcp.pop %v687
  %v707 = vmul.f32 1.0, %v706
  %v708 = vrcp.pop %v688
  %v709 = vmul.f32 1.0, %v708
  %v710 = vrcp.pop %v689
  %v711 = vmul.f32 1.0, %v710
  %v712 = vrcp.pop %v690
  %v713 = vmul.f32 1.0, %v712
  %v714 = vrcp.pop %v691
  %v715 = vmul.f32 1.0, %v714
  %v716 = vrcp.pop %v692
  %v717 = vmul.f32 1.0, %v716
  %v718 = vrcp.pop %v693
  %v719 = vmul.f32 1.0, %v718
  %v720 = vrcp.pop %v694
  %v721 = vmul.f32 1.0, %v720
  %v722 = vrcp.pop %v695
  %v723 = vmul.f32 1.0, %v722
  %v724 = vrcp.pop %v696
  %v725 = vmul.f32 1.0, %v724
  %v726 = vrcp.pop %v697
  %v727 = vmul.f32 1.0, %v726
  %v728 = vrcp.pop %v698
  %v729 = vmul.f32 1.0, %v728
  %v730 = vrcp.pop %v699
  %v731 = vmul.f32 1.0, %v730
  %v732 = vmul.f32 %v574, %v701
  %v733 = vmul.f32 %v577, %v703
  %v734 = vmul.f32 %v582, %v705
  %v735 = vmul.f32 %v585, %v707
  %v736 = vmul.f32 %v590, %v709
  %v737 = vmul.f32 %v593, %v711
  %v738 = vmul.f32 %v598, %v713
  %v739 = vmul.f32 %v601, %v715
  %v740 = vmul.f32 %v606, %v717
  %v741 = vmul.f32 %v609, %v719
  %v742 = vmul.f32 %v614, %v721
  %v743 = vmul.f32 %v617, %v723
  %v744 = vmul.f32 %v622, %v725
  %v745 = vmul.f32 %v625, %v727
  %v746 = vmul.f32 %v630, %v729
  %v747 = vmul.f32 %v633, %v731
  %v748 = vld [vmem:[%s5] sm:$0xf]
  %v749 = vld [vmem:[%s5 + $0x4] sm:$0xf]
  %v750 = vld [vmem:[%s6] sm:$0x1]
  %v751 = vpack.c.bf16 %v733, %v732
  %v752 = vpack.c.bf16 %v735, %v734
  %v753 = vpack.c.bf16 %v737, %v736
  %v754 = vpack.c.bf16 %v739, %v738
  %v755 = vpack.c.bf16 %v741, %v740
  %v756 = vpack.c.bf16 %v743, %v742
  %v757 = vpack.c.bf16 %v745, %v744
  %v758 = vpack.c.bf16 %v747, %v746
  %v760 = vlaneseq
  %v761 = vshrl.u32 %v760, 7
  %v762 = vsub.s32 0, %v761
  %v763 = vrot.slane %v750, %v762
  %v767 = vunpack.c.l.b16 %v748
  %v768 = vunpack.c.l.b16 %v749
  %v769 = vpack.c.b16 %v768, %v767
  %vm771 = vcmask 130048
  %v773 = vsel %vm771, %v751, 0
  %v776 = vsel %vm771, %v752, 0
  %v779 = vsel %vm771, %v753, 0
  %v782 = vsel %vm771, %v754, 0
  %v785 = vsel %vm771, %v755, 0
  %v788 = vsel %vm771, %v756, 0
  %v791 = vsel %vm771, %v757, 0
  %v794 = vsel %vm771, %v758, 0
  %796 = vmatprep.subr.bf16.mxu0 0
  %797 = vmatpush1.bf16.msra.mxu0 %v769
  %798 = vmatprep.subr.bf16.mxu0 0
  %799 = vmatpush1.bf16.msra.mxu0 0
  %800 = vmatprep.subr.bf16.mxu0 0
  %801 = vmatpush1.bf16.msra.mxu0 0
  %802 = vmatprep.subr.bf16.mxu0 0
  %803 = vmatpush1.bf16.msra.mxu0 0
  %804 = vmatprep.subr.bf16.mxu0 0
  %805 = vmatpush1.bf16.msra.mxu0 0
  %806 = vmatprep.subr.bf16.mxu0 0
  %807 = vmatpush1.bf16.msra.mxu0 0
  %808 = vmatprep.subr.bf16.mxu0 0
  %809 = vmatpush1.bf16.msra.mxu0 0
  %810 = vmatprep.subr.bf16.mxu0 0
  %811 = vmatpush1.bf16.msra.mxu0 0
  %812 = vmatprep.subr.bf16.mxu0 0
  %813 = vmatpush1.bf16.msra.mxu0 0
  %814 = vmatprep.subr.bf16.mxu0 0
  %815 = vmatpush1.bf16.msra.mxu0 0
  %816 = vmatprep.subr.bf16.mxu0 0
  %817 = vmatpush1.bf16.msra.mxu0 0
  %818 = vmatprep.subr.bf16.mxu0 0
  %819 = vmatpush1.bf16.msra.mxu0 0
  %820 = vmatprep.subr.bf16.mxu0 0
  %821 = vmatpush1.bf16.msra.mxu0 0
  %822 = vmatprep.subr.bf16.mxu0 0
  %823 = vmatpush1.bf16.msra.mxu0 0
  %824 = vmatprep.subr.bf16.mxu0 0
  %825 = vmatpush1.bf16.msra.mxu0 0
  %826 = vmatprep.subr.bf16.mxu0 0
  %827 = vmatpush1.bf16.msra.mxu0 0
  %828 = vmatprep.mubr.bf16.mxu0 0
  %829 = vmatmul.mubr.bf16.gmra.mrb[0].mxu0 %v773
  %v830 = vpop.f32.mrb[0].mxu0
  %v831 = vadd.f32 %v763, %v830
  %v832 = vpop.f32.mrb[0].mxu0
  %v833 = vpop.f32.mrb[0].mxu0
  %v834 = vadd.f32 %v763, %v833
  %v835 = vpop.f32.mrb[0].mxu0
  %836 = vmatprep.mubr.bf16.mxu0 0
  %837 = vmatmul.mubr.bf16.gmra.mrb[0].mxu0 %v776
  %v838 = vpop.f32.mrb[0].mxu0
  %v839 = vadd.f32 %v763, %v838
  %v840 = vpop.f32.mrb[0].mxu0
  %v841 = vpop.f32.mrb[0].mxu0
  %v842 = vadd.f32 %v763, %v841
  %v843 = vpop.f32.mrb[0].mxu0
  %844 = vmatprep.mubr.bf16.mxu0 0
  %845 = vmatmul.mubr.bf16.gmra.mrb[0].mxu0 %v779
  %v846 = vpop.f32.mrb[0].mxu0
  %v847 = vadd.f32 %v763, %v846
  %v848 = vpop.f32.mrb[0].mxu0
  %v849 = vpop.f32.mrb[0].mxu0
  %v850 = vadd.f32 %v763, %v849
  %v851 = vpop.f32.mrb[0].mxu0
  %852 = vmatprep.mubr.bf16.mxu0 0
  %853 = vmatmul.mubr.bf16.gmra.mrb[0].mxu0 %v782
  %v854 = vpop.f32.mrb[0].mxu0
  %v855 = vadd.f32 %v763, %v854
  %v856 = vpop.f32.mrb[0].mxu0
  %v857 = vpop.f32.mrb[0].mxu0
  %v858 = vadd.f32 %v763, %v857
  %v859 = vpop.f32.mrb[0].mxu0
  %860 = vmatprep.mubr.bf16.mxu0 0
  %861 = vmatmul.mubr.bf16.gmra.mrb[0].mxu0 %v785
  %v862 = vpop.f32.mrb[0].mxu0
  %v863 = vadd.f32 %v763, %v862
  %v864 = vpop.f32.mrb[0].mxu0
  %v865 = vpop.f32.mrb[0].mxu0
  %v866 = vadd.f32 %v763, %v865
  %v867 = vpop.f32.mrb[0].mxu0
  %868 = vmatprep.mubr.bf16.mxu0 0
  %869 = vmatmul.mubr.bf16.gmra.mrb[0].mxu0 %v788
  %v870 = vpop.f32.mrb[0].mxu0
  %v871 = vadd.f32 %v763, %v870
  %v872 = vpop.f32.mrb[0].mxu0
  %v873 = vpop.f32.mrb[0].mxu0
  %v874 = vadd.f32 %v763, %v873
  %v875 = vpop.f32.mrb[0].mxu0
  %876 = vmatprep.mubr.bf16.mxu0 0
  %877 = vmatmul.mubr.bf16.gmra.mrb[0].mxu0 %v791
  %v878 = vpop.f32.mrb[0].mxu0
  %v879 = vadd.f32 %v763, %v878
  %v880 = vpop.f32.mrb[0].mxu0
  %v881 = vpop.f32.mrb[0].mxu0
  %v882 = vadd.f32 %v763, %v881
  %v883 = vpop.f32.mrb[0].mxu0
  %884 = vmatprep.mubr.bf16.mxu0 0
  %885 = vmatmul.mubr.bf16.gmra.mrb[0].mxu0 %v794
  %v886 = vpop.f32.mrb[0].mxu0
  %v887 = vadd.f32 %v763, %v886
  %v888 = vpop.f32.mrb[0].mxu0
  %v889 = vpop.f32.mrb[0].mxu0
  %v890 = vadd.f32 %v763, %v889
  %v891 = vpop.f32.mrb[0].mxu0
  %892 = vdwg.mxu0
  %v893 = vxor.u32 %v831, 2147483648
  %v894 = vxor.u32 %v834, 2147483648
  %v895 = vxor.u32 %v839, 2147483648
  %v896 = vxor.u32 %v842, 2147483648
  %v897 = vxor.u32 %v847, 2147483648
  %v898 = vxor.u32 %v850, 2147483648
  %v899 = vxor.u32 %v855, 2147483648
  %v900 = vxor.u32 %v858, 2147483648
  %v901 = vxor.u32 %v863, 2147483648
  %v902 = vxor.u32 %v866, 2147483648
  %v903 = vxor.u32 %v871, 2147483648
  %v904 = vxor.u32 %v874, 2147483648
  %v905 = vxor.u32 %v879, 2147483648
  %v906 = vxor.u32 %v882, 2147483648
  %v907 = vxor.u32 %v887, 2147483648
  %v908 = vxor.u32 %v890, 2147483648
  %v909 = vmul.f32 %v893, 1.442695
  %v910 = vpow.pop %v909
  %v911 = vmul.f32 %v894, 1.442695
  %v912 = vpow.pop %v911
  %v913 = vmul.f32 %v895, 1.442695
  %v914 = vpow.pop %v913
  %v915 = vmul.f32 %v896, 1.442695
  %v916 = vpow.pop %v915
  %v917 = vmul.f32 %v897, 1.442695
  %v918 = vpow.pop %v917
  %v919 = vmul.f32 %v898, 1.442695
  %v920 = vpow.pop %v919
  %v921 = vmul.f32 %v899, 1.442695
  %v922 = vpow.pop %v921
  %v923 = vmul.f32 %v900, 1.442695
  %v924 = vpow.pop %v923
  %v925 = vmul.f32 %v901, 1.442695
  %v926 = vpow.pop %v925
  %v927 = vmul.f32 %v902, 1.442695
  %v928 = vpow.pop %v927
  %v929 = vmul.f32 %v903, 1.442695
  %v930 = vpow.pop %v929
  %v931 = vmul.f32 %v904, 1.442695
  %v932 = vpow.pop %v931
  %v933 = vmul.f32 %v905, 1.442695
  %v934 = vpow.pop %v933
  %v935 = vmul.f32 %v906, 1.442695
  %v936 = vpow.pop %v935
  %v937 = vmul.f32 %v907, 1.442695
  %v938 = vpow.pop %v937
  %v939 = vmul.f32 %v908, 1.442695
  %v940 = vpow.pop %v939
  %v941 = vadd.f32 %v910, 1.0
  %v942 = vadd.f32 %v912, 1.0
  %v943 = vadd.f32 %v914, 1.0
  %v944 = vadd.f32 %v916, 1.0
  %v945 = vadd.f32 %v918, 1.0
  %v946 = vadd.f32 %v920, 1.0
  %v947 = vadd.f32 %v922, 1.0
  %v948 = vadd.f32 %v924, 1.0
  %v949 = vadd.f32 %v926, 1.0
  %v950 = vadd.f32 %v928, 1.0
  %v951 = vadd.f32 %v930, 1.0
  %v952 = vadd.f32 %v932, 1.0
  %v953 = vadd.f32 %v934, 1.0
  %v954 = vadd.f32 %v936, 1.0
  %v955 = vadd.f32 %v938, 1.0
  %v956 = vadd.f32 %v940, 1.0
  %v957 = vrcp.pop %v941
  %v958 = vmul.f32 1.0, %v957
  %v959 = vrcp.pop %v942
  %v960 = vmul.f32 1.0, %v959
  %v961 = vrcp.pop %v943
  %v962 = vmul.f32 1.0, %v961
  %v963 = vrcp.pop %v944
  %v964 = vmul.f32 1.0, %v963
  %v965 = vrcp.pop %v945
  %v966 = vmul.f32 1.0, %v965
  %v967 = vrcp.pop %v946
  %v968 = vmul.f32 1.0, %v967
  %v969 = vrcp.pop %v947
  %v970 = vmul.f32 1.0, %v969
  %v971 = vrcp.pop %v948
  %v972 = vmul.f32 1.0, %v971
  %v973 = vrcp.pop %v949
  %v974 = vmul.f32 1.0, %v973
  %v975 = vrcp.pop %v950
  %v976 = vmul.f32 1.0, %v975
  %v977 = vrcp.pop %v951
  %v978 = vmul.f32 1.0, %v977
  %v979 = vrcp.pop %v952
  %v980 = vmul.f32 1.0, %v979
  %v981 = vrcp.pop %v953
  %v982 = vmul.f32 1.0, %v981
  %v983 = vrcp.pop %v954
  %v984 = vmul.f32 1.0, %v983
  %v985 = vrcp.pop %v955
  %v986 = vmul.f32 1.0, %v985
  %v987 = vrcp.pop %v956
  %v988 = vmul.f32 1.0, %v987
  %v989 = vmul.f32 %v831, %v958
  %v990 = vmul.f32 %v834, %v960
  %v991 = vmul.f32 %v839, %v962
  %v992 = vmul.f32 %v842, %v964
  %v993 = vmul.f32 %v847, %v966
  %v994 = vmul.f32 %v850, %v968
  %v995 = vmul.f32 %v855, %v970
  %v996 = vmul.f32 %v858, %v972
  %v997 = vmul.f32 %v863, %v974
  %v998 = vmul.f32 %v866, %v976
  %v999 = vmul.f32 %v871, %v978
  %v1000 = vmul.f32 %v874, %v980
  %v1001 = vmul.f32 %v879, %v982
  %v1002 = vmul.f32 %v882, %v984
  %v1003 = vmul.f32 %v887, %v986
  %v1004 = vmul.f32 %v890, %v988
  %vm1005 = vcmask 261120
  %1006 = vst.msk [vmem:[%s7] sm:$0xff] %vm1005, %v989
  %1007 = vst.msk [vmem:[%s7 + $0x8] sm:$0xff] %vm1005, %v990
  %1008 = vst.msk [vmem:[%s7 + $0x10] sm:$0xff] %vm1005, %v991
  %1009 = vst.msk [vmem:[%s7 + $0x18] sm:$0xff] %vm1005, %v992
  %1010 = vst.msk [vmem:[%s7 + $0x20] sm:$0xff] %vm1005, %v993
  %1011 = vst.msk [vmem:[%s7 + $0x28] sm:$0xff] %vm1005, %v994
  %1012 = vst.msk [vmem:[%s7 + $0x30] sm:$0xff] %vm1005, %v995
  %1013 = vst.msk [vmem:[%s7 + $0x38] sm:$0xff] %vm1005, %v996
  %1014 = vst.msk [vmem:[%s7 + $0x40] sm:$0xff] %vm1005, %v997
  %1015 = vst.msk [vmem:[%s7 + $0x48] sm:$0xff] %vm1005, %v998
  %1016 = vst.msk [vmem:[%s7 + $0x50] sm:$0xff] %vm1005, %v999
  %1017 = vst.msk [vmem:[%s7 + $0x58] sm:$0xff] %vm1005, %v1000
  %1018 = vst.msk [vmem:[%s7 + $0x60] sm:$0xff] %vm1005, %v1001
  %1019 = vst.msk [vmem:[%s7 + $0x68] sm:$0xff] %vm1005, %v1002
  %1020 = vst.msk [vmem:[%s7 + $0x70] sm:$0xff] %vm1005, %v1003
  %1021 = vst.msk [vmem:[%s7 + $0x78] sm:$0xff] %vm1005, %v1004
  // Predicated region
  $region30: #{tpu_custom_call.1} parent=0 // pred_check
    _
  $region31: #{tpu_custom_call.1} parent=0 // pred_check_branch
    %1023 = sbr.rel (0) target = $region33
  $region32: #{tpu_custom_call.1} parent=0 // pred_region
    _
  $region33: #{tpu_custom_call.1} parent=0 // pred_fallthru
    _
  // Predicated region
  $region34: #{tpu_custom_call.1} parent=0 // pred_check
    _
  $region35: #{tpu_custom_call.1} parent=0 // pred_check_branch
    %1025 = sbr.rel (0) target = $region37
  $region36: #{tpu_custom_call.1} parent=0 // pred_region
    _
  $region37: #{tpu_custom_call.1} parent=0 // pred_fallthru
    _

// kernel: tpu_custom_call.1
$region0: #{tpu_custom_call.1}
  #allocation0 [shape = 'u32[]', space=smem, size = 0x4, offset = 0x4, fixed_abs, tag = 'smem constant byte address 0x4 - core index']
  #allocation1 [shape = 'u32[144,128]{1,0:T(1,128)}', space=vmem, size = 0x12000, scoped, tag = 'internal scratch']
  %s0 = inlined_call_operand.vmem [shape: bf16[128,256], index: 0, kind: input, shape index: {}]
  %s1 = inlined_call_operand.vmem [shape: bf16[256,64], index: 1, kind: input, shape index: {}]
  %s2 = inlined_call_operand.vmem [shape: f32[1,64], index: 2, kind: input, shape index: {}]
  %s3 = inlined_call_operand.vmem [shape: bf16[64,16], index: 3, kind: input, shape index: {}]
  %s4 = inlined_call_operand.vmem [shape: f32[1,16], index: 4, kind: input, shape index: {}]
  %s5 = inlined_call_operand.vmem [shape: bf16[16,32], index: 5, kind: input, shape index: {}]
  %s6 = inlined_call_operand.vmem [shape: f32[1,32], index: 6, kind: input, shape index: {}]
  %s7 = inlined_call_operand.vmem [shape: f32[128,32], index: 7, kind: output, shape index: {}]
  %s8 = sld [smem:[#allocation0]]
  $region38: #{tpu_custom_call.1} parent=0
    _
  %s10 = ssub.s32 1, %s8
  %s11 = scalar_select 0, %s10, %s8
  // Predicated region
  $region2: #{tpu_custom_call.1} parent=0 // pred_check
    _
  $region3: #{tpu_custom_call.1} parent=0 // pred_check_branch
    %13 = sbr.rel (0) target = $region5
  $region4: #{tpu_custom_call.1} parent=0 // pred_region
    _
  $region5: #{tpu_custom_call.1} parent=0 // pred_fallthru
    _
  // Predicated region
  $region6: #{tpu_custom_call.1} parent=0 // pred_check
    _
  $region7: #{tpu_custom_call.1} parent=0 // pred_check_branch
    %15 = sbr.rel (0) target = $region9
  $region8: #{tpu_custom_call.1} parent=0 // pred_region
    _
  $region9: #{tpu_custom_call.1} parent=0 // pred_fallthru
    _
  // Predicated region
  $region10: #{tpu_custom_call.1} parent=0 // pred_check
    _
  $region11: #{tpu_custom_call.1} parent=0 // pred_check_branch
    %17 = sbr.rel (0) target = $region13
  $region12: #{tpu_custom_call.1} parent=0 // pred_region
    _
  $region13: #{tpu_custom_call.1} parent=0 // pred_fallthru
    _
  // Predicated region
  $region14: #{tpu_custom_call.1} parent=0 // pred_check
    _
  $region15: #{tpu_custom_call.1} parent=0 // pred_check_branch
    %19 = sbr.rel (0) target = $region17
  $region16: #{tpu_custom_call.1} parent=0 // pred_region
    _
  $region17: #{tpu_custom_call.1} parent=0 // pred_fallthru
    _
  // Predicated region
  $region18: #{tpu_custom_call.1} parent=0 // pred_check
    _
  $region19: #{tpu_custom_call.1} parent=0 // pred_check_branch
    %21 = sbr.rel (0) target = $region21
  $region20: #{tpu_custom_call.1} parent=0 // pred_region
    _
  $region21: #{tpu_custom_call.1} parent=0 // pred_fallthru
    _
  // Predicated region
  $region22: #{tpu_custom_call.1} parent=0 // pred_check
    _
  $region23: #{tpu_custom_call.1} parent=0 // pred_check_branch
    %23 = sbr.rel (0) target = $region25
  $region24: #{tpu_custom_call.1} parent=0 // pred_region
    _
  $region25: #{tpu_custom_call.1} parent=0 // pred_fallthru
    _
  // Predicated region
  $region26: #{tpu_custom_call.1} parent=0 // pred_check
    _
  $region27: #{tpu_custom_call.1} parent=0 // pred_check_branch
    %25 = sbr.rel (0) target = $region29
  $region28: #{tpu_custom_call.1} parent=0 // pred_region
    _
  $region29: #{tpu_custom_call.1} parent=0 // pred_fallthru
    _
  %v27 = vld [vmem:[%s0] sm:$0xff]
  %v28 = vld [vmem:[%s0 + $0x8] sm:$0xff]
  %v29 = vld [vmem:[%s0 + $0x10] sm:$0xff]
  %v30 = vld [vmem:[%s0 + $0x18] sm:$0xff]
  %v31 = vld [vmem:[%s0 + $0x20] sm:$0xff]
  %v32 = vld [vmem:[%s0 + $0x28] sm:$0xff]
  %v33 = vld [vmem:[%s0 + $0x30] sm:$0xff]
  %v34 = vld [vmem:[%s0 + $0x38] sm:$0xff]
  %v35 = vld [vmem:[%s0 + $0x40] sm:$0xff]
  %v36 = vld [vmem:[%s0 + $0x48] sm:$0xff]
  %v37 = vld [vmem:[%s0 + $0x50] sm:$0xff]
  %v38 = vld [vmem:[%s0 + $0x58] sm:$0xff]
  %v39 = vld [vmem:[%s0 + $0x60] sm:$0xff]
  %v40 = vld [vmem:[%s0 + $0x68] sm:$0xff]
  %v41 = vld [vmem:[%s0 + $0x70] sm:$0xff]
  %v42 = vld [vmem:[%s0 + $0x78] sm:$0xff]
  %v43 = vld [vmem:[%s1] sm:$0xf]
  %v44 = vld [vmem:[%s1 + $0x4] sm:$0xf]
  %v45 = vld [vmem:[%s1 + $0x8] sm:$0xf]
  %v46 = vld [vmem:[%s1 + $0xc] sm:$0xf]
  %v47 = vld [vmem:[%s1 + $0x10] sm:$0xf]
  %v48 = vld [vmem:[%s1 + $0x14] sm:$0xf]
  %v49 = vld [vmem:[%s1 + $0x18] sm:$0xf]
  %v50 = vld [vmem:[%s1 + $0x1c] sm:$0xf]
  %v51 = vld [vmem:[%s1 + $0x20] sm:$0xf]
  %v52 = vld [vmem:[%s1 + $0x24] sm:$0xf]
  %v53 = vld [vmem:[%s1 + $0x28] sm:$0xf]
  %v54 = vld [vmem:[%s1 + $0x2c] sm:$0xf]
  %v55 = vld [vmem:[%s1 + $0x30] sm:$0xf]
  %v56 = vld [vmem:[%s1 + $0x34] sm:$0xf]
  %v57 = vld [vmem:[%s1 + $0x38] sm:$0xf]
  %v58 = vld [vmem:[%s1 + $0x3c] sm:$0xf]
  %v59 = vld [vmem:[%s1 + $0x40] sm:$0xf]
  %v60 = vld [vmem:[%s1 + $0x44] sm:$0xf]
  %v61 = vld [vmem:[%s1 + $0x48] sm:$0xf]
  %v62 = vld [vmem:[%s1 + $0x4c] sm:$0xf]
  %v63 = vld [vmem:[%s1 + $0x50] sm:$0xf]
  %v64 = vld [vmem:[%s1 + $0x54] sm:$0xf]
  %v65 = vld [vmem:[%s1 + $0x58] sm:$0xf]
  %v66 = vld [vmem:[%s1 + $0x5c] sm:$0xf]
  %v67 = vld [vmem:[%s1 + $0x60] sm:$0xf]
  %v68 = vld [vmem:[%s1 + $0x64] sm:$0xf]
  %v69 = vld [vmem:[%s1 + $0x68] sm:$0xf]
  %v70 = vld [vmem:[%s1 + $0x6c] sm:$0xf]
  %v71 = vld [vmem:[%s1 + $0x70] sm:$0xf]
  %v72 = vld [vmem:[%s1 + $0x74] sm:$0xf]
  %v73 = vld [vmem:[%s1 + $0x78] sm:$0xf]
  %v74 = vld [vmem:[%s1 + $0x7c] sm:$0xf]
  %v75 = vld [vmem:[%s2] sm:$0x1]
  %v77 = vlaneseq
  %v78 = vshrl.u32 %v77, 7
  %v79 = vsub.s32 0, %v78
  %v80 = vrot.slane %v75, %v79
  %v98 = vunpack.c.l.b16 %v27
  %v99 = vunpack.c.h.b16 %v27
  %v100 = vunpack.c.l.b16 %v28
  %v101 = vunpack.c.h.b16 %v28
  %v102 = vunpack.c.l.b16 %v29
  %v103 = vunpack.c.h.b16 %v29
  %v104 = vunpack.c.l.b16 %v30
  %v105 = vunpack.c.h.b16 %v30
  %v106 = vunpack.c.l.b16 %v31
  %v107 = vunpack.c.h.b16 %v31
  %v108 = vunpack.c.l.b16 %v32
  %v109 = vunpack.c.h.b16 %v32
  %v110 = vunpack.c.l.b16 %v33
  %v111 = vunpack.c.h.b16 %v33
  %v112 = vunpack.c.l.b16 %v34
  %v113 = vunpack.c.h.b16 %v34
  %v114 = vunpack.c.l.b16 %v35
  %v115 = vunpack.c.h.b16 %v35
  %v116 = vunpack.c.l.b16 %v36
  %v117 = vunpack.c.h.b16 %v36
  %v118 = vunpack.c.l.b16 %v37
  %v119 = vunpack.c.h.b16 %v37
  %v120 = vunpack.c.l.b16 %v38
  %v121 = vunpack.c.h.b16 %v38
  %v122 = vunpack.c.l.b16 %v39
  %v123 = vunpack.c.h.b16 %v39
  %v124 = vunpack.c.l.b16 %v40
  %v125 = vunpack.c.h.b16 %v40
  %v126 = vunpack.c.l.b16 %v41
  %v127 = vunpack.c.h.b16 %v41
  %v128 = vunpack.c.l.b16 %v42
  %v129 = vunpack.c.h.b16 %v42
  %v130 = vpack.c.b16 %v100, %v98
  %v131 = vpack.c.b16 %v101, %v99
  %v132 = vpack.c.b16 %v104, %v102
  %v133 = vpack.c.b16 %v105, %v103
  %v134 = vpack.c.b16 %v108, %v106
  %v135 = vpack.c.b16 %v109, %v107
  %v136 = vpack.c.b16 %v112, %v110
  %v137 = vpack.c.b16 %v113, %v111
  %v138 = vpack.c.b16 %v116, %v114
  %v139 = vpack.c.b16 %v117, %v115
  %v140 = vpack.c.b16 %v120, %v118
  %v141 = vpack.c.b16 %v121, %v119
  %v142 = vpack.c.b16 %v124, %v122
  %v143 = vpack.c.b16 %v125, %v123
  %v144 = vpack.c.b16 %v128, %v126
  %v145 = vpack.c.b16 %v129, %v127
  %v194 = vunpack.c.l.b16 %v43
  %v195 = vunpack.c.l.b16 %v44
  %v196 = vunpack.c.l.b16 %v45
  %v197 = vunpack.c.l.b16 %v46
  %v198 = vunpack.c.l.b16 %v47
  %v199 = vunpack.c.l.b16 %v48
  %v200 = vunpack.c.l.b16 %v49
  %v201 = vunpack.c.l.b16 %v50
  %v202 = vunpack.c.l.b16 %v51
  %v203 = vunpack.c.l.b16 %v52
  %v204 = vunpack.c.l.b16 %v53
  %v205 = vunpack.c.l.b16 %v54
  %v206 = vunpack.c.l.b16 %v55
  %v207 = vunpack.c.l.b16 %v56
  %v208 = vunpack.c.l.b16 %v57
  %v209 = vunpack.c.l.b16 %v58
  %v210 = vunpack.c.l.b16 %v59
  %v211 = vunpack.c.l.b16 %v60
  %v212 = vunpack.c.l.b16 %v61
  %v213 = vunpack.c.l.b16 %v62
  %v214 = vunpack.c.l.b16 %v63
  %v215 = vunpack.c.l.b16 %v64
  %v216 = vunpack.c.l.b16 %v65
  %v217 = vunpack.c.l.b16 %v66
  %v218 = vunpack.c.l.b16 %v67
  %v219 = vunpack.c.l.b16 %v68
  %v220 = vunpack.c.l.b16 %v69
  %v221 = vunpack.c.l.b16 %v70
  %v222 = vunpack.c.l.b16 %v71
  %v223 = vunpack.c.l.b16 %v72
  %v224 = vunpack.c.l.b16 %v73
  %v225 = vunpack.c.l.b16 %v74
  %v226 = vpack.c.b16 %v195, %v194
  %v227 = vpack.c.b16 %v197, %v196
  %v228 = vpack.c.b16 %v199, %v198
  %v229 = vpack.c.b16 %v201, %v200
  %v230 = vpack.c.b16 %v203, %v202
  %v231 = vpack.c.b16 %v205, %v204
  %v232 = vpack.c.b16 %v207, %v206
  %v233 = vpack.c.b16 %v209, %v208
  %v234 = vpack.c.b16 %v211, %v210
  %v235 = vpack.c.b16 %v213, %v212
  %v236 = vpack.c.b16 %v215, %v214
  %v237 = vpack.c.b16 %v217, %v216
  %v238 = vpack.c.b16 %v219, %v218
  %v239 = vpack.c.b16 %v221, %v220
  %v240 = vpack.c.b16 %v223, %v222
  %v241 = vpack.c.b16 %v225, %v224
  %258 = vmatprep.subr.bf16.mxu0 0
  %259 = vmatpush1.bf16.msra.mxu0 %v226
  %260 = vmatprep.subr.bf16.mxu0 0
  %261 = vmatpush1.bf16.msra.mxu0 %v227
  %262 = vmatprep.subr.bf16.mxu0 0
  %263 = vmatpush1.bf16.msra.mxu0 %v228
  %264 = vmatprep.subr.bf16.mxu0 0
  %265 = vmatpush1.bf16.msra.mxu0 %v229
  %266 = vmatprep.subr.bf16.mxu0 0
  %267 = vmatpush1.bf16.msra.mxu0 %v230
  %268 = vmatprep.subr.bf16.mxu0 0
  %269 = vmatpush1.bf16.msra.mxu0 %v231
  %270 = vmatprep.subr.bf16.mxu0 0
  %271 = vmatpush1.bf16.msra.mxu0 %v232
  %272 = vmatprep.subr.bf16.mxu0 0
  %273 = vmatpush1.bf16.msra.mxu0 %v233
  %274 = vmatprep.subr.bf16.mxu0 0
  %275 = vmatpush1.bf16.msra.mxu0 %v234
  %276 = vmatprep.subr.bf16.mxu0 0
  %277 = vmatpush1.bf16.msra.mxu0 %v235
  %278 = vmatprep.subr.bf16.mxu0 0
  %279 = vmatpush1.bf16.msra.mxu0 %v236
  %280 = vmatprep.subr.bf16.mxu0 0
  %281 = vmatpush1.bf16.msra.mxu0 %v237
  %282 = vmatprep.subr.bf16.mxu0 0
  %283 = vmatpush1.bf16.msra.mxu0 %v238
  %284 = vmatprep.subr.bf16.mxu0 0
  %285 = vmatpush1.bf16.msra.mxu0 %v239
  %286 = vmatprep.subr.bf16.mxu0 0
  %287 = vmatpush1.bf16.msra.mxu0 %v240
  %288 = vmatprep.subr.bf16.mxu0 0
  %289 = vmatpush1.bf16.msra.mxu0 %v241
  %290 = vmatprep.mubr.bf16.mxu0 %v131
  %291 = vmatmul.mubr.bf16.gmra.mrb[0].mxu0 %v130
  %v292 = vpop.f32.mrb[0].mxu0
  %v293 = vadd.f32 %v80, %v292
  %v294 = vpop.f32.mrb[0].mxu0
  %v295 = vpop.f32.mrb[0].mxu0
  %v296 = vadd.f32 %v80, %v295
  %v297 = vpop.f32.mrb[0].mxu0
  %298 = vmatprep.mubr.bf16.mxu0 %v133
  %299 = vmatmul.mubr.bf16.gmra.mrb[0].mxu0 %v132
  %v300 = vpop.f32.mrb[0].mxu0
  %v301 = vadd.f32 %v80, %v300
  %v302 = vpop.f32.mrb[0].mxu0
  %v303 = vpop.f32.mrb[0].mxu0
  %v304 = vadd.f32 %v80, %v303
  %v305 = vpop.f32.mrb[0].mxu0
  %306 = vmatprep.mubr.bf16.mxu0 %v135
  %307 = vmatmul.mubr.bf16.gmra.mrb[0].mxu0 %v134
  %v308 = vpop.f32.mrb[0].mxu0
  %v309 = vadd.f32 %v80, %v308
  %v310 = vpop.f32.mrb[0].mxu0
  %v311 = vpop.f32.mrb[0].mxu0
  %v312 = vadd.f32 %v80, %v311
  %v313 = vpop.f32.mrb[0].mxu0
  %314 = vmatprep.mubr.bf16.mxu0 %v137
  %315 = vmatmul.mubr.bf16.gmra.mrb[0].mxu0 %v136
  %v316 = vpop.f32.mrb[0].mxu0
  %v317 = vadd.f32 %v80, %v316
  %v318 = vpop.f32.mrb[0].mxu0
  %v319 = vpop.f32.mrb[0].mxu0
  %v320 = vadd.f32 %v80, %v319
  %v321 = vpop.f32.mrb[0].mxu0
  %322 = vmatprep.mubr.bf16.mxu0 %v139
  %323 = vmatmul.mubr.bf16.gmra.mrb[0].mxu0 %v138
  %v324 = vpop.f32.mrb[0].mxu0
  %v325 = vadd.f32 %v80, %v324
  %v326 = vpop.f32.mrb[0].mxu0
  %v327 = vpop.f32.mrb[0].mxu0
  %v328 = vadd.f32 %v80, %v327
  %v329 = vpop.f32.mrb[0].mxu0
  %330 = vmatprep.mubr.bf16.mxu0 %v141
  %331 = vmatmul.mubr.bf16.gmra.mrb[0].mxu0 %v140
  %v332 = vpop.f32.mrb[0].mxu0
  %v333 = vadd.f32 %v80, %v332
  %v334 = vpop.f32.mrb[0].mxu0
  %v335 = vpop.f32.mrb[0].mxu0
  %v336 = vadd.f32 %v80, %v335
  %v337 = vpop.f32.mrb[0].mxu0
  %338 = vmatprep.mubr.bf16.mxu0 %v143
  %339 = vmatmul.mubr.bf16.gmra.mrb[0].mxu0 %v142
  %v340 = vpop.f32.mrb[0].mxu0
  %v341 = vadd.f32 %v80, %v340
  %v342 = vpop.f32.mrb[0].mxu0
  %v343 = vpop.f32.mrb[0].mxu0
  %v344 = vadd.f32 %v80, %v343
  %v345 = vpop.f32.mrb[0].mxu0
  %346 = vmatprep.mubr.bf16.mxu0 %v145
  %347 = vmatmul.mubr.bf16.gmra.mrb[0].mxu0 %v144
  %v348 = vpop.f32.mrb[0].mxu0
  %v349 = vadd.f32 %v80, %v348
  %v350 = vpop.f32.mrb[0].mxu0
  %v351 = vpop.f32.mrb[0].mxu0
  %v352 = vadd.f32 %v80, %v351
  %v353 = vpop.f32.mrb[0].mxu0
  %354 = vdwg.mxu0
  %v355 = vxor.u32 %v293, 2147483648
  %v356 = vxor.u32 %v296, 2147483648
  %v357 = vxor.u32 %v301, 2147483648
  %v358 = vxor.u32 %v304, 2147483648
  %v359 = vxor.u32 %v309, 2147483648
  %v360 = vxor.u32 %v312, 2147483648
  %v361 = vxor.u32 %v317, 2147483648
  %v362 = vxor.u32 %v320, 2147483648
  %v363 = vxor.u32 %v325, 2147483648
  %v364 = vxor.u32 %v328, 2147483648
  %v365 = vxor.u32 %v333, 2147483648
  %v366 = vxor.u32 %v336, 2147483648
  %v367 = vxor.u32 %v341, 2147483648
  %v368 = vxor.u32 %v344, 2147483648
  %v369 = vxor.u32 %v349, 2147483648
  %v370 = vxor.u32 %v352, 2147483648
  %v371 = vmul.f32 %v355, 1.442695
  %v372 = vpow.pop %v371
  %v373 = vmul.f32 %v356, 1.442695
  %v374 = vpow.pop %v373
  %v375 = vmul.f32 %v357, 1.442695
  %v376 = vpow.pop %v375
  %v377 = vmul.f32 %v358, 1.442695
  %v378 = vpow.pop %v377
  %v379 = vmul.f32 %v359, 1.442695
  %v380 = vpow.pop %v379
  %v381 = vmul.f32 %v360, 1.442695
  %v382 = vpow.pop %v381
  %v383 = vmul.f32 %v361, 1.442695
  %v384 = vpow.pop %v383
  %v385 = vmul.f32 %v362, 1.442695
  %v386 = vpow.pop %v385
  %v387 = vmul.f32 %v363, 1.442695
  %v388 = vpow.pop %v387
  %v389 = vmul.f32 %v364, 1.442695
  %v390 = vpow.pop %v389
  %v391 = vmul.f32 %v365, 1.442695
  %v392 = vpow.pop %v391
  %v393 = vmul.f32 %v366, 1.442695
  %v394 = vpow.pop %v393
  %v395 = vmul.f32 %v367, 1.442695
  %v396 = vpow.pop %v395
  %v397 = vmul.f32 %v368, 1.442695
  %v398 = vpow.pop %v397
  %v399 = vmul.f32 %v369, 1.442695
  %v400 = vpow.pop %v399
  %v401 = vmul.f32 %v370, 1.442695
  %v402 = vpow.pop %v401
  %v403 = vadd.f32 %v372, 1.0
  %v404 = vadd.f32 %v374, 1.0
  %v405 = vadd.f32 %v376, 1.0
  %v406 = vadd.f32 %v378, 1.0
  %v407 = vadd.f32 %v380, 1.0
  %v408 = vadd.f32 %v382, 1.0
  %v409 = vadd.f32 %v384, 1.0
  %v410 = vadd.f32 %v386, 1.0
  %v411 = vadd.f32 %v388, 1.0
  %v412 = vadd.f32 %v390, 1.0
  %v413 = vadd.f32 %v392, 1.0
  %v414 = vadd.f32 %v394, 1.0
  %v415 = vadd.f32 %v396, 1.0
  %v416 = vadd.f32 %v398, 1.0
  %v417 = vadd.f32 %v400, 1.0
  %v418 = vadd.f32 %v402, 1.0
  %v419 = vrcp.pop %v403
  %v420 = vmul.f32 1.0, %v419
  %v421 = vrcp.pop %v404
  %v422 = vmul.f32 1.0, %v421
  %v423 = vrcp.pop %v405
  %v424 = vmul.f32 1.0, %v423
  %v425 = vrcp.pop %v406
  %v426 = vmul.f32 1.0, %v425
  %v427 = vrcp.pop %v407
  %v428 = vmul.f32 1.0, %v427
  %v429 = vrcp.pop %v408
  %v430 = vmul.f32 1.0, %v429
  %v431 = vrcp.pop %v409
  %v432 = vmul.f32 1.0, %v431
  %v433 = vrcp.pop %v410
  %v434 = vmul.f32 1.0, %v433
  %v435 = vrcp.pop %v411
  %v436 = vmul.f32 1.0, %v435
  %v437 = vrcp.pop %v412
  %v438 = vmul.f32 1.0, %v437
  %v439 = vrcp.pop %v413
  %v440 = vmul.f32 1.0, %v439
  %v441 = vrcp.pop %v414
  %v442 = vmul.f32 1.0, %v441
  %v443 = vrcp.pop %v415
  %v444 = vmul.f32 1.0, %v443
  %v445 = vrcp.pop %v416
  %v446 = vmul.f32 1.0, %v445
  %v447 = vrcp.pop %v417
  %v448 = vmul.f32 1.0, %v447
  %v449 = vrcp.pop %v418
  %v450 = vmul.f32 1.0, %v449
  %v451 = vmul.f32 %v293, %v420
  %v452 = vmul.f32 %v296, %v422
  %v453 = vmul.f32 %v301, %v424
  %v454 = vmul.f32 %v304, %v426
  %v455 = vmul.f32 %v309, %v428
  %v456 = vmul.f32 %v312, %v430
  %v457 = vmul.f32 %v317, %v432
  %v458 = vmul.f32 %v320, %v434
  %v459 = vmul.f32 %v325, %v436
  %v460 = vmul.f32 %v328, %v438
  %v461 = vmul.f32 %v333, %v440
  %v462 = vmul.f32 %v336, %v442
  %v463 = vmul.f32 %v341, %v444
  %v464 = vmul.f32 %v344, %v446
  %v465 = vmul.f32 %v349, %v448
  %v466 = vmul.f32 %v352, %v450
  %v467 = vld [vmem:[%s3] sm:$0xf]
  %v468 = vld [vmem:[%s3 + $0x4] sm:$0xf]
  %v469 = vld [vmem:[%s3 + $0x8] sm:$0xf]
  %v470 = vld [vmem:[%s3 + $0xc] sm:$0xf]
  %v471 = vld [vmem:[%s3 + $0x10] sm:$0xf]
  %v472 = vld [vmem:[%s3 + $0x14] sm:$0xf]
  %v473 = vld [vmem:[%s3 + $0x18] sm:$0xf]
  %v474 = vld [vmem:[%s3 + $0x1c] sm:$0xf]
  %v475 = vld [vmem:[%s4] sm:$0x1]
  %v476 = vpack.c.bf16 %v452, %v451
  %v477 = vpack.c.bf16 %v454, %v453
  %v478 = vpack.c.bf16 %v456, %v455
  %v479 = vpack.c.bf16 %v458, %v457
  %v480 = vpack.c.bf16 %v460, %v459
  %v481 = vpack.c.bf16 %v462, %v461
  %v482 = vpack.c.bf16 %v464, %v463
  %v483 = vpack.c.bf16 %v466, %v465
  %v485 = vlaneseq
  %v486 = vshrl.u32 %v485, 7
  %v487 = vsub.s32 0, %v486
  %v488 = vrot.slane %v475, %v487
  %v498 = vunpack.c.l.b16 %v467
  %v499 = vunpack.c.l.b16 %v468
  %v500 = vunpack.c.l.b16 %v469
  %v501 = vunpack.c.l.b16 %v470
  %v502 = vunpack.c.l.b16 %v471
  %v503 = vunpack.c.l.b16 %v472
  %v504 = vunpack.c.l.b16 %v473
  %v505 = vunpack.c.l.b16 %v474
  %v506 = vpack.c.b16 %v499, %v498
  %v507 = vpack.c.b16 %v501, %v500
  %v508 = vpack.c.b16 %v503, %v502
  %v509 = vpack.c.b16 %v505, %v504
  %vm514 = vcmask 523264
  %v516 = vsel %vm514, %v476, 0
  %v519 = vsel %vm514, %v477, 0
  %v522 = vsel %vm514, %v478, 0
  %v525 = vsel %vm514, %v479, 0
  %v528 = vsel %vm514, %v480, 0
  %v531 = vsel %vm514, %v481, 0
  %v534 = vsel %vm514, %v482, 0
  %v537 = vsel %vm514, %v483, 0
  %539 = vmatprep.subr.bf16.mxu0 0
  %540 = vmatpush1.bf16.msra.mxu0 %v506
  %541 = vmatprep.subr.bf16.mxu0 0
  %542 = vmatpush1.bf16.msra.mxu0 %v507
  %543 = vmatprep.subr.bf16.mxu0 0
  %544 = vmatpush1.bf16.msra.mxu0 %v508
  %545 = vmatprep.subr.bf16.mxu0 0
  %546 = vmatpush1.bf16.msra.mxu0 %v509
  %547 = vmatprep.subr.bf16.mxu0 0
  %548 = vmatpush1.bf16.msra.mxu0 0
  %549 = vmatprep.subr.bf16.mxu0 0
  %550 = vmatpush1.bf16.msra.mxu0 0
  %551 = vmatprep.subr.bf16.mxu0 0
  %552 = vmatpush1.bf16.msra.mxu0 0
  %553 = vmatprep.subr.bf16.mxu0 0
  %554 = vmatpush1.bf16.msra.mxu0 0
  %555 = vmatprep.subr.bf16.mxu0 0
  %556 = vmatpush1.bf16.msra.mxu0 0
  %557 = vmatprep.subr.bf16.mxu0 0
  %558 = vmatpush1.bf16.msra.mxu0 0
  %559 = vmatprep.subr.bf16.mxu0 0
  %560 = vmatpush1.bf16.msra.mxu0 0
  %561 = vmatprep.subr.bf16.mxu0 0
  %562 = vmatpush1.bf16.msra.mxu0 0
  %563 = vmatprep.subr.bf16.mxu0 0
  %564 = vmatpush1.bf16.msra.mxu0 0
  %565 = vmatprep.subr.bf16.mxu0 0
  %566 = vmatpush1.bf16.msra.mxu0 0
  %567 = vmatprep.subr.bf16.mxu0 0
  %568 = vmatpush1.bf16.msra.mxu0 0
  %569 = vmatprep.subr.bf16.mxu0 0
  %570 = vmatpush1.bf16.msra.mxu0 0
  %571 = vmatprep.mubr.bf16.mxu0 0
  %572 = vmatmul.mubr.bf16.gmra.mrb[0].mxu0 %v516
  %v573 = vpop.f32.mrb[0].mxu0
  %v574 = vadd.f32 %v488, %v573
  %v575 = vpop.f32.mrb[0].mxu0
  %v576 = vpop.f32.mrb[0].mxu0
  %v577 = vadd.f32 %v488, %v576
  %v578 = vpop.f32.mrb[0].mxu0
  %579 = vmatprep.mubr.bf16.mxu0 0
  %580 = vmatmul.mubr.bf16.gmra.mrb[0].mxu0 %v519
  %v581 = vpop.f32.mrb[0].mxu0
  %v582 = vadd.f32 %v488, %v581
  %v583 = vpop.f32.mrb[0].mxu0
  %v584 = vpop.f32.mrb[0].mxu0
  %v585 = vadd.f32 %v488, %v584
  %v586 = vpop.f32.mrb[0].mxu0
  %587 = vmatprep.mubr.bf16.mxu0 0
  %588 = vmatmul.mubr.bf16.gmra.mrb[0].mxu0 %v522
  %v589 = vpop.f32.mrb[0].mxu0
  %v590 = vadd.f32 %v488, %v589
  %v591 = vpop.f32.mrb[0].mxu0
  %v592 = vpop.f32.mrb[0].mxu0
  %v593 = vadd.f32 %v488, %v592
  %v594 = vpop.f32.mrb[0].mxu0
  %595 = vmatprep.mubr.bf16.mxu0 0
  %596 = vmatmul.mubr.bf16.gmra.mrb[0].mxu0 %v525
  %v597 = vpop.f32.mrb[0].mxu0
  %v598 = vadd.f32 %v488, %v597
  %v599 = vpop.f32.mrb[0].mxu0
  %v600 = vpop.f32.mrb[0].mxu0
  %v601 = vadd.f32 %v488, %v600
  %v602 = vpop.f32.mrb[0].mxu0
  %603 = vmatprep.mubr.bf16.mxu0 0
  %604 = vmatmul.mubr.bf16.gmra.mrb[0].mxu0 %v528
  %v605 = vpop.f32.mrb[0].mxu0
  %v606 = vadd.f32 %v488, %v605
  %v607 = vpop.f32.mrb[0].mxu0
  %v608 = vpop.f32.mrb[0].mxu0
  %v609 = vadd.f32 %v488, %v608
  %v610 = vpop.f32.mrb[0].mxu0
  %611 = vmatprep.mubr.bf16.mxu0 0
  %612 = vmatmul.mubr.bf16.gmra.mrb[0].mxu0 %v531
  %v613 = vpop.f32.mrb[0].mxu0
  %v614 = vadd.f32 %v488, %v613
  %v615 = vpop.f32.mrb[0].mxu0
  %v616 = vpop.f32.mrb[0].mxu0
  %v617 = vadd.f32 %v488, %v616
  %v618 = vpop.f32.mrb[0].mxu0
  %619 = vmatprep.mubr.bf16.mxu0 0
  %620 = vmatmul.mubr.bf16.gmra.mrb[0].mxu0 %v534
  %v621 = vpop.f32.mrb[0].mxu0
  %v622 = vadd.f32 %v488, %v621
  %v623 = vpop.f32.mrb[0].mxu0
  %v624 = vpop.f32.mrb[0].mxu0
  %v625 = vadd.f32 %v488, %v624
  %v626 = vpop.f32.mrb[0].mxu0
  %627 = vmatprep.mubr.bf16.mxu0 0
  %628 = vmatmul.mubr.bf16.gmra.mrb[0].mxu0 %v537
  %v629 = vpop.f32.mrb[0].mxu0
  %v630 = vadd.f32 %v488, %v629
  %v631 = vpop.f32.mrb[0].mxu0
  %v632 = vpop.f32.mrb[0].mxu0
  %v633 = vadd.f32 %v488, %v632
  %v634 = vpop.f32.mrb[0].mxu0
  %635 = vdwg.mxu0
  %v636 = vxor.u32 %v574, 2147483648
  %v637 = vxor.u32 %v577, 2147483648
  %v638 = vxor.u32 %v582, 2147483648
  %v639 = vxor.u32 %v585, 2147483648
  %v640 = vxor.u32 %v590, 2147483648
  %v641 = vxor.u32 %v593, 2147483648
  %v642 = vxor.u32 %v598, 2147483648
  %v643 = vxor.u32 %v601, 2147483648
  %v644 = vxor.u32 %v606, 2147483648
  %v645 = vxor.u32 %v609, 2147483648
  %v646 = vxor.u32 %v614, 2147483648
  %v647 = vxor.u32 %v617, 2147483648
  %v648 = vxor.u32 %v622, 2147483648
  %v649 = vxor.u32 %v625, 2147483648
  %v650 = vxor.u32 %v630, 2147483648
  %v651 = vxor.u32 %v633, 2147483648
  %v652 = vmul.f32 %v636, 1.442695
  %v653 = vpow.pop %v652
  %v654 = vmul.f32 %v637, 1.442695
  %v655 = vpow.pop %v654
  %v656 = vmul.f32 %v638, 1.442695
  %v657 = vpow.pop %v656
  %v658 = vmul.f32 %v639, 1.442695
  %v659 = vpow.pop %v658
  %v660 = vmul.f32 %v640, 1.442695
  %v661 = vpow.pop %v660
  %v662 = vmul.f32 %v641, 1.442695
  %v663 = vpow.pop %v662
  %v664 = vmul.f32 %v642, 1.442695
  %v665 = vpow.pop %v664
  %v666 = vmul.f32 %v643, 1.442695
  %v667 = vpow.pop %v666
  %v668 = vmul.f32 %v644, 1.442695
  %v669 = vpow.pop %v668
  %v670 = vmul.f32 %v645, 1.442695
  %v671 = vpow.pop %v670
  %v672 = vmul.f32 %v646, 1.442695
  %v673 = vpow.pop %v672
  %v674 = vmul.f32 %v647, 1.442695
  %v675 = vpow.pop %v674
  %v676 = vmul.f32 %v648, 1.442695
  %v677 = vpow.pop %v676
  %v678 = vmul.f32 %v649, 1.442695
  %v679 = vpow.pop %v678
  %v680 = vmul.f32 %v650, 1.442695
  %v681 = vpow.pop %v680
  %v682 = vmul.f32 %v651, 1.442695
  %v683 = vpow.pop %v682
  %v684 = vadd.f32 %v653, 1.0
  %v685 = vadd.f32 %v655, 1.0
  %v686 = vadd.f32 %v657, 1.0
  %v687 = vadd.f32 %v659, 1.0
  %v688 = vadd.f32 %v661, 1.0
  %v689 = vadd.f32 %v663, 1.0
  %v690 = vadd.f32 %v665, 1.0
  %v691 = vadd.f32 %v667, 1.0
  %v692 = vadd.f32 %v669, 1.0
  %v693 = vadd.f32 %v671, 1.0
  %v694 = vadd.f32 %v673, 1.0
  %v695 = vadd.f32 %v675, 1.0
  %v696 = vadd.f32 %v677, 1.0
  %v697 = vadd.f32 %v679, 1.0
  %v698 = vadd.f32 %v681, 1.0
  %v699 = vadd.f32 %v683, 1.0
  %v700 = vrcp.pop %v684
  %v701 = vmul.f32 1.0, %v700
  %v702 = vrcp.pop %v685
  %v703 = vmul.f32 1.0, %v702
  %v704 = vrcp.pop %v686
  %v705 = vmul.f32 1.0, %v704
  %v706 = vrcp.pop %v687
  %v707 = vmul.f32 1.0, %v706
  %v708 = vrcp.pop %v688
  %v709 = vmul.f32 1.0, %v708
  %v710 = vrcp.pop %v689
  %v711 = vmul.f32 1.0, %v710
  %v712 = vrcp.pop %v690
  %v713 = vmul.f32 1.0, %v712
  %v714 = vrcp.pop %v691
  %v715 = vmul.f32 1.0, %v714
  %v716 = vrcp.pop %v692
  %v717 = vmul.f32 1.0, %v716
  %v718 = vrcp.pop %v693
  %v719 = vmul.f32 1.0, %v718
  %v720 = vrcp.pop %v694
  %v721 = vmul.f32 1.0, %v720
  %v722 = vrcp.pop %v695
  %v723 = vmul.f32 1.0, %v722
  %v724 = vrcp.pop %v696
  %v725 = vmul.f32 1.0, %v724
  %v726 = vrcp.pop %v697
  %v727 = vmul.f32 1.0, %v726
  %v728 = vrcp.pop %v698
  %v729 = vmul.f32 1.0, %v728
  %v730 = vrcp.pop %v699
  %v731 = vmul.f32 1.0, %v730
  %v732 = vmul.f32 %v574, %v701
  %v733 = vmul.f32 %v577, %v703
  %v734 = vmul.f32 %v582, %v705
  %v735 = vmul.f32 %v585, %v707
  %v736 = vmul.f32 %v590, %v709
  %v737 = vmul.f32 %v593, %v711
  %v738 = vmul.f32 %v598, %v713
  %v739 = vmul.f32 %v601, %v715
  %v740 = vmul.f32 %v606, %v717
  %v741 = vmul.f32 %v609, %v719
  %v742 = vmul.f32 %v614, %v721
  %v743 = vmul.f32 %v617, %v723
  %v744 = vmul.f32 %v622, %v725
  %v745 = vmul.f32 %v625, %v727
  %v746 = vmul.f32 %v630, %v729
  %v747 = vmul.f32 %v633, %v731
  %v748 = vld [vmem:[%s5] sm:$0xf]
  %v749 = vld [vmem:[%s5 + $0x4] sm:$0xf]
  %v750 = vld [vmem:[%s6] sm:$0x1]
  %v751 = vpack.c.bf16 %v733, %v732
  %v752 = vpack.c.bf16 %v735, %v734
  %v753 = vpack.c.bf16 %v737, %v736
  %v754 = vpack.c.bf16 %v739, %v738
  %v755 = vpack.c.bf16 %v741, %v740
  %v756 = vpack.c.bf16 %v743, %v742
  %v757 = vpack.c.bf16 %v745, %v744
  %v758 = vpack.c.bf16 %v747, %v746
  %v760 = vlaneseq
  %v761 = vshrl.u32 %v760, 7
  %v762 = vsub.s32 0, %v761
  %v763 = vrot.slane %v750, %v762
  %v767 = vunpack.c.l.b16 %v748
  %v768 = vunpack.c.l.b16 %v749
  %v769 = vpack.c.b16 %v768, %v767
  %vm771 = vcmask 130048
  %v773 = vsel %vm771, %v751, 0
  %v776 = vsel %vm771, %v752, 0
  %v779 = vsel %vm771, %v753, 0
  %v782 = vsel %vm771, %v754, 0
  %v785 = vsel %vm771, %v755, 0
  %v788 = vsel %vm771, %v756, 0
  %v791 = vsel %vm771, %v757, 0
  %v794 = vsel %vm771, %v758, 0
  %796 = vmatprep.subr.bf16.mxu0 0
  %797 = vmatpush1.bf16.msra.mxu0 %v769
  %798 = vmatprep.subr.bf16.mxu0 0
  %799 = vmatpush1.bf16.msra.mxu0 0
  %800 = vmatprep.subr.bf16.mxu0 0
  %801 = vmatpush1.bf16.msra.mxu0 0
  %802 = vmatprep.subr.bf16.mxu0 0
  %803 = vmatpush1.bf16.msra.mxu0 0
  %804 = vmatprep.subr.bf16.mxu0 0
  %805 = vmatpush1.bf16.msra.mxu0 0
  %806 = vmatprep.subr.bf16.mxu0 0
  %807 = vmatpush1.bf16.msra.mxu0 0
  %808 = vmatprep.subr.bf16.mxu0 0
  %809 = vmatpush1.bf16.msra.mxu0 0
  %810 = vmatprep.subr.bf16.mxu0 0
  %811 = vmatpush1.bf16.msra.mxu0 0
  %812 = vmatprep.subr.bf16.mxu0 0
  %813 = vmatpush1.bf16.msra.mxu0 0
  %814 = vmatprep.subr.bf16.mxu0 0
  %815 = vmatpush1.bf16.msra.mxu0 0
  %816 = vmatprep.subr.bf16.mxu0 0
  %817 = vmatpush1.bf16.msra.mxu0 0
  %818 = vmatprep.subr.bf16.mxu0 0
  %819 = vmatpush1.bf16.msra.mxu0 0
  %820 = vmatprep.subr.bf16.mxu0 0
  %821 = vmatpush1.bf16.msra.mxu0 0
  %822 = vmatprep.subr.bf16.mxu0 0
  %823 = vmatpush1.bf16.msra.mxu0 0
  %824 = vmatprep.subr.bf16.mxu0 0
  %825 = vmatpush1.bf16.msra.mxu0 0
  %826 = vmatprep.subr.bf16.mxu0 0
  %827 = vmatpush1.bf16.msra.mxu0 0
  %828 = vmatprep.mubr.bf16.mxu0 0
  %829 = vmatmul.mubr.bf16.gmra.mrb[0].mxu0 %v773
  %v830 = vpop.f32.mrb[0].mxu0
  %v831 = vadd.f32 %v763, %v830
  %v832 = vpop.f32.mrb[0].mxu0
  %v833 = vpop.f32.mrb[0].mxu0
  %v834 = vadd.f32 %v763, %v833
  %v835 = vpop.f32.mrb[0].mxu0
  %836 = vmatprep.mubr.bf16.mxu0 0
  %837 = vmatmul.mubr.bf16.gmra.mrb[0].mxu0 %v776
  %v838 = vpop.f32.mrb[0].mxu0
  %v839 = vadd.f32 %v763, %v838
  %v840 = vpop.f32.mrb[0].mxu0
  %v841 = vpop.f32.mrb[0].mxu0
  %v842 = vadd.f32 %v763, %v841
  %v843 = vpop.f32.mrb[0].mxu0
  %844 = vmatprep.mubr.bf16.mxu0 0
  %845 = vmatmul.mubr.bf16.gmra.mrb[0].mxu0 %v779
  %v846 = vpop.f32.mrb[0].mxu0
  %v847 = vadd.f32 %v763, %v846
  %v848 = vpop.f32.mrb[0].mxu0
  %v849 = vpop.f32.mrb[0].mxu0
  %v850 = vadd.f32 %v763, %v849
  %v851 = vpop.f32.mrb[0].mxu0
  %852 = vmatprep.mubr.bf16.mxu0 0
  %853 = vmatmul.mubr.bf16.gmra.mrb[0].mxu0 %v782
  %v854 = vpop.f32.mrb[0].mxu0
  %v855 = vadd.f32 %v763, %v854
  %v856 = vpop.f32.mrb[0].mxu0
  %v857 = vpop.f32.mrb[0].mxu0
  %v858 = vadd.f32 %v763, %v857
  %v859 = vpop.f32.mrb[0].mxu0
  %860 = vmatprep.mubr.bf16.mxu0 0
  %861 = vmatmul.mubr.bf16.gmra.mrb[0].mxu0 %v785
  %v862 = vpop.f32.mrb[0].mxu0
  %v863 = vadd.f32 %v763, %v862
  %v864 = vpop.f32.mrb[0].mxu0
  %v865 = vpop.f32.mrb[0].mxu0
  %v866 = vadd.f32 %v763, %v865
  %v867 = vpop.f32.mrb[0].mxu0
  %868 = vmatprep.mubr.bf16.mxu0 0
  %869 = vmatmul.mubr.bf16.gmra.mrb[0].mxu0 %v788
  %v870 = vpop.f32.mrb[0].mxu0
  %v871 = vadd.f32 %v763, %v870
  %v872 = vpop.f32.mrb[0].mxu0
  %v873 = vpop.f32.mrb[0].mxu0
  %v874 = vadd.f32 %v763, %v873
  %v875 = vpop.f32.mrb[0].mxu0
  %876 = vmatprep.mubr.bf16.mxu0 0
  %877 = vmatmul.mubr.bf16.gmra.mrb[0].mxu0 %v791
  %v878 = vpop.f32.mrb[0].mxu0
  %v879 = vadd.f32 %v763, %v878
  %v880 = vpop.f32.mrb[0].mxu0
  %v881 = vpop.f32.mrb[0].mxu0
  %v882 = vadd.f32 %v763, %v881
  %v883 = vpop.f32.mrb[0].mxu0
  %884 = vmatprep.mubr.bf16.mxu0 0
  %885 = vmatmul.mubr.bf16.gmra.mrb[0].mxu0 %v794
  %v886 = vpop.f32.mrb[0].mxu0
  %v887 = vadd.f32 %v763, %v886
  %v888 = vpop.f32.mrb[0].mxu0
  %v889 = vpop.f32.mrb[0].mxu0
  %v890 = vadd.f32 %v763, %v889
  %v891 = vpop.f32.mrb[0].mxu0
  %892 = vdwg.mxu0
  %v893 = vxor.u32 %v831, 2147483648
  %v894 = vxor.u32 %v834, 2147483648
  %v895 = vxor.u32 %v839, 2147483648
  %v896 = vxor.u32 %v842, 2147483648
  %v897 = vxor.u32 %v847, 2147483648
  %v898 = vxor.u32 %v850, 2147483648
  %v899 = vxor.u32 %v855, 2147483648
  %v900 = vxor.u32 %v858, 2147483648
  %v901 = vxor.u32 %v863, 2147483648
  %v902 = vxor.u32 %v866, 2147483648
  %v903 = vxor.u32 %v871, 2147483648
  %v904 = vxor.u32 %v874, 2147483648
  %v905 = vxor.u32 %v879, 2147483648
  %v906 = vxor.u32 %v882, 2147483648
  %v907 = vxor.u32 %v887, 2147483648
  %v908 = vxor.u32 %v890, 2147483648
  %v909 = vmul.f32 %v893, 1.442695
  %v910 = vpow.pop %v909
  %v911 = vmul.f32 %v894, 1.442695
  %v912 = vpow.pop %v911
  %v913 = vmul.f32 %v895, 1.442695
  %v914 = vpow.pop %v913
  %v915 = vmul.f32 %v896, 1.442695
  %v916 = vpow.pop %v915
  %v917 = vmul.f32 %v897, 1.442695
  %v918 = vpow.pop %v917
  %v919 = vmul.f32 %v898, 1.442695
  %v920 = vpow.pop %v919
  %v921 = vmul.f32 %v899, 1.442695
  %v922 = vpow.pop %v921
  %v923 = vmul.f32 %v900, 1.442695
  %v924 = vpow.pop %v923
  %v925 = vmul.f32 %v901, 1.442695
  %v926 = vpow.pop %v925
  %v927 = vmul.f32 %v902, 1.442695
  %v928 = vpow.pop %v927
  %v929 = vmul.f32 %v903, 1.442695
  %v930 = vpow.pop %v929
  %v931 = vmul.f32 %v904, 1.442695
  %v932 = vpow.pop %v931
  %v933 = vmul.f32 %v905, 1.442695
  %v934 = vpow.pop %v933
  %v935 = vmul.f32 %v906, 1.442695
  %v936 = vpow.pop %v935
  %v937 = vmul.f32 %v907, 1.442695
  %v938 = vpow.pop %v937
  %v939 = vmul.f32 %v908, 1.442695
  %v940 = vpow.pop %v939
  %v941 = vadd.f32 %v910, 1.0
  %v942 = vadd.f32 %v912, 1.0
  %v943 = vadd.f32 %v914, 1.0
  %v944 = vadd.f32 %v916, 1.0
  %v945 = vadd.f32 %v918, 1.0
  %v946 = vadd.f32 %v920, 1.0
  %v947 = vadd.f32 %v922, 1.0
  %v948 = vadd.f32 %v924, 1.0
  %v949 = vadd.f32 %v926, 1.0
  %v950 = vadd.f32 %v928, 1.0
  %v951 = vadd.f32 %v930, 1.0
  %v952 = vadd.f32 %v932, 1.0
  %v953 = vadd.f32 %v934, 1.0
  %v954 = vadd.f32 %v936, 1.0
  %v955 = vadd.f32 %v938, 1.0
  %v956 = vadd.f32 %v940, 1.0
  %v957 = vrcp.pop %v941
  %v958 = vmul.f32 1.0, %v957
  %v959 = vrcp.pop %v942
  %v960 = vmul.f32 1.0, %v959
  %v961 = vrcp.pop %v943
  %v962 = vmul.f32 1.0, %v961
  %v963 = vrcp.pop %v944
  %v964 = vmul.f32 1.0, %v963
  %v965 = vrcp.pop %v945
  %v966 = vmul.f32 1.0, %v965
  %v967 = vrcp.pop %v946
  %v968 = vmul.f32 1.0, %v967
  %v969 = vrcp.pop %v947
  %v970 = vmul.f32 1.0, %v969
  %v971 = vrcp.pop %v948
  %v972 = vmul.f32 1.0, %v971
  %v973 = vrcp.pop %v949
  %v974 = vmul.f32 1.0, %v973
  %v975 = vrcp.pop %v950
  %v976 = vmul.f32 1.0, %v975
  %v977 = vrcp.pop %v951
  %v978 = vmul.f32 1.0, %v977
  %v979 = vrcp.pop %v952
  %v980 = vmul.f32 1.0, %v979
  %v981 = vrcp.pop %v953
  %v982 = vmul.f32 1.0, %v981
  %v983 = vrcp.pop %v954
  %v984 = vmul.f32 1.0, %v983
  %v985 = vrcp.pop %v955
  %v986 = vmul.f32 1.0, %v985
  %v987 = vrcp.pop %v956
  %v988 = vmul.f32 1.0, %v987
  %v989 = vmul.f32 %v831, %v958
  %v990 = vmul.f32 %v834, %v960
  %v991 = vmul.f32 %v839, %v962
  %v992 = vmul.f32 %v842, %v964
  %v993 = vmul.f32 %v847, %v966
  %v994 = vmul.f32 %v850, %v968
  %v995 = vmul.f32 %v855, %v970
  %v996 = vmul.f32 %v858, %v972
  %v997 = vmul.f32 %v863, %v974
  %v998 = vmul.f32 %v866, %v976
  %v999 = vmul.f32 %v871, %v978
  %v1000 = vmul.f32 %v874, %v980
  %v1001 = vmul.f32 %v879, %v982
  %v1002 = vmul.f32 %v882, %v984
  %v1003 = vmul.f32 %v887, %v986
  %v1004 = vmul.f32 %v890, %v988
  %vm1005 = vcmask 261120
  %1006 = vst.msk [vmem:[%s7] sm:$0xff] %vm1005, %v989
  %1007 = vst.msk [vmem:[%s7 + $0x8] sm:$0xff] %vm1005, %v990
  %1008 = vst.msk [vmem:[%s7 + $0x10] sm:$0xff] %vm1005, %v991
  %1009 = vst.msk [vmem:[%s7 + $0x18] sm:$0xff] %vm1005, %v992
  %1010 = vst.msk [vmem:[%s7 + $0x20] sm:$0xff] %vm1005, %v993
  %1011 = vst.msk [vmem:[%s7 + $0x28] sm:$0xff] %vm1005, %v994
  %1012 = vst.msk [vmem:[%s7 + $0x30] sm:$0xff] %vm1005, %v995
  %1013 = vst.msk [vmem:[%s7 + $0x38] sm:$0xff] %vm1005, %v996
  %1014 = vst.msk [vmem:[%s7 + $0x40] sm:$0xff] %vm1005, %v997
  %1015 = vst.msk [vmem:[%s7 + $0x48] sm:$0xff] %vm1005, %v998
  %1016 = vst.msk [vmem:[%s7 + $0x50] sm:$0xff] %vm1005, %v999
  %1017 = vst.msk [vmem:[%s7 + $0x58] sm:$0xff] %vm1005, %v1000
  %1018 = vst.msk [vmem:[%s7 + $0x60] sm:$0xff] %vm1005, %v1001
  %1019 = vst.msk [vmem:[%s7 + $0x68] sm:$0xff] %vm1005, %v1002
  %1020 = vst.msk [vmem:[%s7 + $0x70] sm:$0xff] %vm1005, %v1003
  %1021 = vst.msk [vmem:[%s7 + $0x78] sm:$0xff] %vm1005, %v1004
  // Predicated region
  $region30: #{tpu_custom_call.1} parent=0 // pred_check
    _
  $region31: #{tpu_custom_call.1} parent=0 // pred_check_branch
    %1023 = sbr.rel (0) target = $region33
  $region32: #{tpu_custom_call.1} parent=0 // pred_region
    _
  $region33: #{tpu_custom_call.1} parent=0 // pred_fallthru
    _
  // Predicated region
  $region34: #{tpu_custom_call.1} parent=0 // pred_check
    _
  $region35: #{tpu_custom_call.1} parent=0 // pred_check_branch
    %1025 = sbr.rel (0) target = $region37
  $region36: #{tpu_custom_call.1} parent=0 // pred_region
    _
  $region37: #{tpu_custom_call.1} parent=0 // pred_fallthru
    _

</llo_original>
